<compile_context>
chip_gen: v5e
topology: v5e:2x2
jax: 0.10.0
libtpu: 0.0.40
codegen_flags: <defaults>
</compile_context>

<pallas_src>
import numpy as np
import jax
import jax.numpy as jnp
from jax import lax
from jax.experimental import pallas as pl
from jax.experimental.pallas import tpu as pltpu

# ---- static irreps configuration -------------------------------------------
IN_MULS = dict(e0=4, o1=2, e1=2, o0=2)   # 0e, 1o, 1e, 0o multiplicities (input)
OUT_MULS = dict(e0=4, o1=2, e1=2, o0=2)  # same for output

IN_DIM = IN_MULS["e0"] + 3 * IN_MULS["o1"] + 3 * IN_MULS["e1"] + IN_MULS["o0"]    # 18
OUT_DIM = OUT_MULS["e0"] + 3 * OUT_MULS["o1"] + 3 * OUT_MULS["e1"] + OUT_MULS["o0"]  # 18
SH_DIM = 4

W_IN = {"0e": 6, "1o": 8, "1e": 6, "0o": 4}
W_OUT = {"0e": 4, "1o": 2, "1e": 2, "0o": 2}
W_NUMEL = sum(W_IN[k] * W_OUT[k] for k in ("0e", "1o", "1e", "0o"))  # 60

# fused feature-major row offsets:  [ x (18) | sh (4) | weight (60) ]
X_OFF = 0
SH_OFF = IN_DIM                      # 18
W_OFF = IN_DIM + SH_DIM              # 22
PACK_DIM = IN_DIM + SH_DIM + W_NUMEL  # 82

W0E_OFF = W_OFF + 0    # 24 rows, element (i,o) at i*4+o
W1O_OFF = W_OFF + 24   # 16 rows, element (i,c) at i*2+c
W1E_OFF = W_OFF + 40   # 12 rows, element (i,c) at i*2+c
W0O_OFF = W_OFF + 52   #  8 rows, element (i,o) at i*2+o

INV_SQRT2 = float(1.0 / np.sqrt(2.0))
INV_SQRT3 = float(1.0 / np.sqrt(3.0))
INV_SQRT6 = float(1.0 / np.sqrt(6.0))
INV_SQRT8 = float(1.0 / np.sqrt(8.0))
INV_SQRT4 = 0.5

SUB = 8      # sublanes per chunk
LANES = 128  # lanes per chunk
MIN_TILE = SUB * LANES  # 1024 edges == one (8,128) f32 vreg per feature row


# ---- kernel -----------------------------------------------------------------
def ftp_kernel(in_ref, out_ref):
    # in_ref : (PACK_DIM, cb, 8, 128)   out_ref : (OUT_DIM, cb, 8, 128)
    n_chunks = in_ref.shape[1]

    def chunk_body(j, carry):
        def ld(row):                       # one feature row of this chunk: (8,128)
            return in_ref[row, j, :, :]

        def st(row, v):                    # dense, unmasked vreg store
            out_ref[row, j, :, :] = v

        s0 = ld(SH_OFF + 0)
        s1 = ld(SH_OFF + 1)
        s2 = ld(SH_OFF + 2)
        s3 = ld(SH_OFF + 3)

        def dot_sh(base):                  # <v, sh1>
            return ld(base) * s1 + ld(base + 1) * s2 + ld(base + 2) * s3

        def cross_sh(base):                # v x sh1
            vx, vy, vz = ld(base), ld(base + 1), ld(base + 2)
            return (vy * s3 - vz * s2, vz * s1 - vx * s3, vx * s2 - vy * s1)

        # ---------------- 0e path -> out rows 0..3 ----------------
        acc = [None] * 4
        for i in range(W_IN["0e"]):                         # 6 input channels
            if i < 4:
                f = ld(X_OFF + i) * s0                      # 0e * sh0
            else:
                f = dot_sh(X_OFF + 4 + 3 * (i - 4)) * INV_SQRT3   # <1o, sh1>
            for o in range(W_OUT["0e"]):
                t = f * ld(W0E_OFF + i * 4 + o)
                acc[o] = t if acc[o] is None else acc[o] + t
        for o in range(W_OUT["0e"]):
            st(o, acc[o] * INV_SQRT6)

        # ---------------- 1o path -> out rows 4..9 (channel-major) ----------------
        acc = [[None] * 3 for _ in range(W_OUT["1o"])]
        for i in range(W_IN["1o"]):                         # 8 input channels
            if i < 4:                                       # 0e * sh1
                a = ld(X_OFF + i)
                f = (a * s1, a * s2, a * s3)
            elif i < 6:                                     # 1o * sh0
                b = X_OFF + 4 + 3 * (i - 4)
                f = (ld(b) * s0, ld(b + 1) * s0, ld(b + 2) * s0)
            else:                                           # cross(1e, sh1)/sqrt2
                cx, cy, cz = cross_sh(X_OFF + 10 + 3 * (i - 6))
                f = (cx * INV_SQRT2, cy * INV_SQRT2, cz * INV_SQRT2)
            for c in range(W_OUT["1o"]):
                wv = ld(W1O_OFF + i * 2 + c)
                for d in range(3):
                    t = f[d] * wv
                    acc[c][d] = t if acc[c][d] is None else acc[c][d] + t
        for c in range(W_OUT["1o"]):
            for d in range(3):
                st(4 + 3 * c + d, acc[c][d] * INV_SQRT8)

        # ---------------- 1e path -> out rows 10..15 (channel-major) ----------------
        acc = [[None] * 3 for _ in range(W_OUT["1e"])]
        for i in range(W_IN["1e"]):                         # 6 input channels
            if i < 2:                                       # cross(1o, sh1)/sqrt2
                cx, cy, cz = cross_sh(X_OFF + 4 + 3 * i)
                f = (cx * INV_SQRT2, cy * INV_SQRT2, cz * INV_SQRT2)
            elif i < 4:                                     # 1e * sh0
                b = X_OFF + 10 + 3 * (i - 2)
                f = (ld(b) * s0, ld(b + 1) * s0, ld(b + 2) * s0)
            else:                                           # 0o * sh1
                bsc = ld(X_OFF + 16 + (i - 4))
                f = (bsc * s1, bsc * s2, bsc * s3)
            for c in range(W_OUT["1e"]):
                wv = ld(W1E_OFF + i * 2 + c)
                for d in range(3):
                    t = f[d] * wv
                    acc[c][d] = t if acc[c][d] is None else acc[c][d] + t
        for c in range(W_OUT["1e"]):
            for d in range(3):
                st(10 + 3 * c + d, acc[c][d] * INV_SQRT6)

        # ---------------- 0o path -> out rows 16..17 ----------------
        acc = [None] * 2
        for i in range(W_IN["0o"]):                         # 4 input channels
            if i < 2:
                f = dot_sh(X_OFF + 10 + 3 * i) * INV_SQRT3  # <1e, sh1>
            else:
                f = ld(X_OFF + 16 + (i - 2)) * s0           # 0o * sh0
            for o in range(W_OUT["0o"]):
                t = f * ld(W0O_OFF + i * 2 + o)
                acc[o] = t if acc[o] is None else acc[o] + t
        for o in range(W_OUT["0o"]):
            st(16 + o, acc[o] * INV_SQRT4)

        return carry

    lax.fori_loop(0, n_chunks, chunk_body, 0)


# ---- wrapper ----------------------------------------------------------------
def faster_tensor_product(x, sh, weight, *, block_edges=8192):
    """x: (N, 18), sh: (N, 4), weight: (N, 60)  ->  (N, 18) float32."""
    n = x.shape[0]
    assert x.shape == (n, IN_DIM) and sh.shape == (n, SH_DIM) and weight.shape == (n, W_NUMEL)

    x = x.astype(jnp.float32)
    sh = sh.astype(jnp.float32)
    weight = weight.astype(jnp.float32)

    tile_e = max(MIN_TILE, (block_edges // MIN_TILE) * MIN_TILE)   # edges per grid step
    n_pad = pl.cdiv(max(n, 1), tile_e) * tile_e                    # ragged N handled by padding
    grid_n = n_pad // tile_e
    cb = tile_e // MIN_TILE                                        # (8,128) chunks per grid step
    n_chunks_total = n_pad // MIN_TILE

    # Layout plumbing (outside the kernel): fuse x/sh/w into one feature-major
    # slab, pad the edge axis, and fold edges into dense (8,128) vreg chunks.
    packed = jnp.concatenate([x, sh, weight], axis=1)              # (n, 82)
    if n_pad != n:
        packed = jnp.pad(packed, ((0, n_pad - n), (0, 0)))
    packed = packed.T.reshape(PACK_DIM, n_chunks_total, SUB, LANES)

    out_t = pl.pallas_call(
        ftp_kernel,
        out_shape=jax.ShapeDtypeStruct((OUT_DIM, n_chunks_total, SUB, LANES), jnp.float32),
        grid=(grid_n,),
        in_specs=[pl.BlockSpec((PACK_DIM, cb, SUB, LANES), lambda i: (0, i, 0, 0))],
        out_specs=pl.BlockSpec((OUT_DIM, cb, SUB, LANES), lambda i: (0, i, 0, 0)),
        compiler_params=pltpu.CompilerParams(dimension_semantics=("parallel",)),
    )(packed)

    out = out_t.reshape(OUT_DIM, n_pad).T
    return out[:n]


# ---- pure-JAX reference (mirrors the torch forward) -------------------------
def reference_forward(x, sh, w):
    sh0, sh1 = sh[:, 0], sh[:, 1:4]
    in0e = x[:, 0:4]
    in1o = x[:, 4:10].reshape(-1, 2, 3)
    in1e = x[:, 10:16].reshape(-1, 2, 3)
    in0o = x[:, 16:18]
    f0e = jnp.concatenate([in0e * sh0[:, None],
                           jnp.sum(in1o * sh1[:, None, :], -1) / np.sqrt(3)], -1)
    f1o = jnp.concatenate([in0e[:, :, None] * sh1[:, None, :],
                           in1o * sh0[:, None, None],
                           jnp.cross(in1e, sh1[:, None, :]) / np.sqrt(2)], 1)
    f1e = jnp.concatenate([jnp.cross(in1o, sh1[:, None, :]) / np.sqrt(2),
                           in1e * sh0[:, None, None],
                           in0o[:, :, None] * sh1[:, None, :]], 1)
    f0o = jnp.concatenate([jnp.sum(in1e * sh1[:, None, :], -1) / np.sqrt(3),
                           in0o * sh0[:, None]], -1)
    w0e = w[:, 0:24].reshape(-1, 6, 4) / np.sqrt(6)
    w1o = w[:, 24:40].reshape(-1, 8, 2) / np.sqrt(8)
    w1e = w[:, 40:52].reshape(-1, 6, 2) / np.sqrt(6)
    w0o = w[:, 52:60].reshape(-1, 4, 2) / np.sqrt(4)
    o0e = jnp.einsum("ni,nio->no", f0e, w0e)
    o1o = jnp.einsum("nid,nic->ncd", f1o, w1o).reshape(-1, 6)
    o1e = jnp.einsum("nid,nic->ncd", f1e, w1e).reshape(-1, 6)
    o0o = jnp.einsum("ni,nio->no", f0o, w0o)
    return jnp.concatenate([o0e, o1o, o1e, o0o], -1)


if __name__ == "__main__":
    N = 3000  # ragged on purpose: exercises padding + multi-step grid
    key = jax.random.PRNGKey(0)
    k1, k2, k3 = jax.random.split(key, 3)
    x = jax.random.normal(k1, (N, IN_DIM), dtype=jnp.float32)
    sh = jax.random.normal(k2, (N, SH_DIM), dtype=jnp.float32)
    weight = jax.random.normal(k3, (N, W_NUMEL), dtype=jnp.float32)

    ref = jax.block_until_ready(reference_forward(x, sh, weight))

    # small-tile path: 2048 edges/step -> grid of 2, 2 chunks per step
    out = jax.block_until_ready(faster_tensor_product(x, sh, weight, block_edges=2048))
    assert out.shape == (N, OUT_DIM)
    np.testing.assert_allclose(np.asarray(out), np.asarray(ref), rtol=1e-5, atol=1e-5)

    # default large-tile path: 8192 edges/step -> grid of 1, 8 chunks per step
    out2 = jax.block_until_ready(faster_tensor_product(x, sh, weight))
    np.testing.assert_allclose(np.asarray(out2), np.asarray(ref), rtol=1e-5, atol=1e-5)

    print("KERNEL_OK")
</pallas_src>

<mosaic_0001>
module attributes {stable_mosaic.version = 11 : i64} {
  func.func @ftp_kernel(%arg0: i32, %arg1: memref<82x2x8x128xf32, #tpu.memory_space<vmem>>, %arg2: memref<18x2x8x128xf32, #tpu.memory_space<vmem>>) attributes {dimension_semantics = [#tpu.dimension_semantics<parallel>], iteration_bounds = array<i64: 2>, scalar_prefetch = 0 : i64, scratch_operands = 0 : i64, tpu.core_type = #tpu.core_type<tc>, window_params = [{transform_indices = @transform_0, window_bounds = array<i64: 82, 2, 8, 128>}, {transform_indices = @transform_1, window_bounds = array<i64: 18, 2, 8, 128>}]} {
    %c0_i32 = arith.constant 0 : i32
    %c2_i32 = arith.constant 2 : i32
    %0 = arith.addi %c0_i32, %c2_i32 : i32
    %c1_i32 = arith.constant 1 : i32
    scf.for %arg3 = %c0_i32 to %0 step %c1_i32  : i32 {
      %c18 = arith.constant 18 : index
      %1 = arith.index_cast %arg3 : i32 to index
      %c0 = arith.constant 0 : index
      %c0_1 = arith.constant 0 : index
      %2 = vector.load %arg1[%c18, %1, %c0, %c0_1] : memref<82x2x8x128xf32, #tpu.memory_space<vmem>>, vector<1x1x8x128xf32>
      %3 = vector.shape_cast %2 : vector<1x1x8x128xf32> to vector<8x128xf32>
      %c19 = arith.constant 19 : index
      %4 = arith.index_cast %arg3 : i32 to index
      %c0_2 = arith.constant 0 : index
      %c0_3 = arith.constant 0 : index
      %5 = vector.load %arg1[%c19, %4, %c0_2, %c0_3] : memref<82x2x8x128xf32, #tpu.memory_space<vmem>>, vector<1x1x8x128xf32>
      %6 = vector.shape_cast %5 : vector<1x1x8x128xf32> to vector<8x128xf32>
      %c20 = arith.constant 20 : index
      %7 = arith.index_cast %arg3 : i32 to index
      %c0_4 = arith.constant 0 : index
      %c0_5 = arith.constant 0 : index
      %8 = vector.load %arg1[%c20, %7, %c0_4, %c0_5] : memref<82x2x8x128xf32, #tpu.memory_space<vmem>>, vector<1x1x8x128xf32>
      %9 = vector.shape_cast %8 : vector<1x1x8x128xf32> to vector<8x128xf32>
      %c21 = arith.constant 21 : index
      %10 = arith.index_cast %arg3 : i32 to index
      %c0_6 = arith.constant 0 : index
      %c0_7 = arith.constant 0 : index
      %11 = vector.load %arg1[%c21, %10, %c0_6, %c0_7] : memref<82x2x8x128xf32, #tpu.memory_space<vmem>>, vector<1x1x8x128xf32>
      %12 = vector.shape_cast %11 : vector<1x1x8x128xf32> to vector<8x128xf32>
      %c0_8 = arith.constant 0 : index
      %13 = arith.index_cast %arg3 : i32 to index
      %c0_9 = arith.constant 0 : index
      %c0_10 = arith.constant 0 : index
      %14 = vector.load %arg1[%c0_8, %13, %c0_9, %c0_10] : memref<82x2x8x128xf32, #tpu.memory_space<vmem>>, vector<1x1x8x128xf32>
      %15 = vector.shape_cast %14 : vector<1x1x8x128xf32> to vector<8x128xf32>
      %16 = arith.mulf %15, %3 : vector<8x128xf32>
      %c22 = arith.constant 22 : index
      %17 = arith.index_cast %arg3 : i32 to index
      %c0_11 = arith.constant 0 : index
      %c0_12 = arith.constant 0 : index
      %18 = vector.load %arg1[%c22, %17, %c0_11, %c0_12] : memref<82x2x8x128xf32, #tpu.memory_space<vmem>>, vector<1x1x8x128xf32>
      %19 = vector.shape_cast %18 : vector<1x1x8x128xf32> to vector<8x128xf32>
      %20 = arith.mulf %16, %19 : vector<8x128xf32>
      %c23 = arith.constant 23 : index
      %21 = arith.index_cast %arg3 : i32 to index
      %c0_13 = arith.constant 0 : index
      %c0_14 = arith.constant 0 : index
      %22 = vector.load %arg1[%c23, %21, %c0_13, %c0_14] : memref<82x2x8x128xf32, #tpu.memory_space<vmem>>, vector<1x1x8x128xf32>
      %23 = vector.shape_cast %22 : vector<1x1x8x128xf32> to vector<8x128xf32>
      %24 = arith.mulf %16, %23 : vector<8x128xf32>
      %c24 = arith.constant 24 : index
      %25 = arith.index_cast %arg3 : i32 to index
      %c0_15 = arith.constant 0 : index
      %c0_16 = arith.constant 0 : index
      %26 = vector.load %arg1[%c24, %25, %c0_15, %c0_16] : memref<82x2x8x128xf32, #tpu.memory_space<vmem>>, vector<1x1x8x128xf32>
      %27 = vector.shape_cast %26 : vector<1x1x8x128xf32> to vector<8x128xf32>
      %28 = arith.mulf %16, %27 : vector<8x128xf32>
      %c25 = arith.constant 25 : index
      %29 = arith.index_cast %arg3 : i32 to index
      %c0_17 = arith.constant 0 : index
      %c0_18 = arith.constant 0 : index
      %30 = vector.load %arg1[%c25, %29, %c0_17, %c0_18] : memref<82x2x8x128xf32, #tpu.memory_space<vmem>>, vector<1x1x8x128xf32>
      %31 = vector.shape_cast %30 : vector<1x1x8x128xf32> to vector<8x128xf32>
      %32 = arith.mulf %16, %31 : vector<8x128xf32>
      %c1 = arith.constant 1 : index
      %33 = arith.index_cast %arg3 : i32 to index
      %c0_19 = arith.constant 0 : index
      %c0_20 = arith.constant 0 : index
      %34 = vector.load %arg1[%c1, %33, %c0_19, %c0_20] : memref<82x2x8x128xf32, #tpu.memory_space<vmem>>, vector<1x1x8x128xf32>
      %35 = vector.shape_cast %34 : vector<1x1x8x128xf32> to vector<8x128xf32>
      %36 = arith.mulf %35, %3 : vector<8x128xf32>
      %c26 = arith.constant 26 : index
      %37 = arith.index_cast %arg3 : i32 to index
      %c0_21 = arith.constant 0 : index
      %c0_22 = arith.constant 0 : index
      %38 = vector.load %arg1[%c26, %37, %c0_21, %c0_22] : memref<82x2x8x128xf32, #tpu.memory_space<vmem>>, vector<1x1x8x128xf32>
      %39 = vector.shape_cast %38 : vector<1x1x8x128xf32> to vector<8x128xf32>
      %40 = arith.mulf %36, %39 : vector<8x128xf32>
      %41 = arith.addf %20, %40 : vector<8x128xf32>
      %c27 = arith.constant 27 : index
      %42 = arith.index_cast %arg3 : i32 to index
      %c0_23 = arith.constant 0 : index
      %c0_24 = arith.constant 0 : index
      %43 = vector.load %arg1[%c27, %42, %c0_23, %c0_24] : memref<82x2x8x128xf32, #tpu.memory_space<vmem>>, vector<1x1x8x128xf32>
      %44 = vector.shape_cast %43 : vector<1x1x8x128xf32> to vector<8x128xf32>
      %45 = arith.mulf %36, %44 : vector<8x128xf32>
      %46 = arith.addf %24, %45 : vector<8x128xf32>
      %c28 = arith.constant 28 : index
      %47 = arith.index_cast %arg3 : i32 to index
      %c0_25 = arith.constant 0 : index
      %c0_26 = arith.constant 0 : index
      %48 = vector.load %arg1[%c28, %47, %c0_25, %c0_26] : memref<82x2x8x128xf32, #tpu.memory_space<vmem>>, vector<1x1x8x128xf32>
      %49 = vector.shape_cast %48 : vector<1x1x8x128xf32> to vector<8x128xf32>
      %50 = arith.mulf %36, %49 : vector<8x128xf32>
      %51 = arith.addf %28, %50 : vector<8x128xf32>
      %c29 = arith.constant 29 : index
      %52 = arith.index_cast %arg3 : i32 to index
      %c0_27 = arith.constant 0 : index
      %c0_28 = arith.constant 0 : index
      %53 = vector.load %arg1[%c29, %52, %c0_27, %c0_28] : memref<82x2x8x128xf32, #tpu.memory_space<vmem>>, vector<1x1x8x128xf32>
      %54 = vector.shape_cast %53 : vector<1x1x8x128xf32> to vector<8x128xf32>
      %55 = arith.mulf %36, %54 : vector<8x128xf32>
      %56 = arith.addf %32, %55 : vector<8x128xf32>
      %c2 = arith.constant 2 : index
      %57 = arith.index_cast %arg3 : i32 to index
      %c0_29 = arith.constant 0 : index
      %c0_30 = arith.constant 0 : index
      %58 = vector.load %arg1[%c2, %57, %c0_29, %c0_30] : memref<82x2x8x128xf32, #tpu.memory_space<vmem>>, vector<1x1x8x128xf32>
      %59 = vector.shape_cast %58 : vector<1x1x8x128xf32> to vector<8x128xf32>
      %60 = arith.mulf %59, %3 : vector<8x128xf32>
      %c30 = arith.constant 30 : index
      %61 = arith.index_cast %arg3 : i32 to index
      %c0_31 = arith.constant 0 : index
      %c0_32 = arith.constant 0 : index
      %62 = vector.load %arg1[%c30, %61, %c0_31, %c0_32] : memref<82x2x8x128xf32, #tpu.memory_space<vmem>>, vector<1x1x8x128xf32>
      %63 = vector.shape_cast %62 : vector<1x1x8x128xf32> to vector<8x128xf32>
      %64 = arith.mulf %60, %63 : vector<8x128xf32>
      %65 = arith.addf %41, %64 : vector<8x128xf32>
      %c31 = arith.constant 31 : index
      %66 = arith.index_cast %arg3 : i32 to index
      %c0_33 = arith.constant 0 : index
      %c0_34 = arith.constant 0 : index
      %67 = vector.load %arg1[%c31, %66, %c0_33, %c0_34] : memref<82x2x8x128xf32, #tpu.memory_space<vmem>>, vector<1x1x8x128xf32>
      %68 = vector.shape_cast %67 : vector<1x1x8x128xf32> to vector<8x128xf32>
      %69 = arith.mulf %60, %68 : vector<8x128xf32>
      %70 = arith.addf %46, %69 : vector<8x128xf32>
      %c32 = arith.constant 32 : index
      %71 = arith.index_cast %arg3 : i32 to index
      %c0_35 = arith.constant 0 : index
      %c0_36 = arith.constant 0 : index
      %72 = vector.load %arg1[%c32, %71, %c0_35, %c0_36] : memref<82x2x8x128xf32, #tpu.memory_space<vmem>>, vector<1x1x8x128xf32>
      %73 = vector.shape_cast %72 : vector<1x1x8x128xf32> to vector<8x128xf32>
      %74 = arith.mulf %60, %73 : vector<8x128xf32>
      %75 = arith.addf %51, %74 : vector<8x128xf32>
      %c33 = arith.constant 33 : index
      %76 = arith.index_cast %arg3 : i32 to index
      %c0_37 = arith.constant 0 : index
      %c0_38 = arith.constant 0 : index
      %77 = vector.load %arg1[%c33, %76, %c0_37, %c0_38] : memref<82x2x8x128xf32, #tpu.memory_space<vmem>>, vector<1x1x8x128xf32>
      %78 = vector.shape_cast %77 : vector<1x1x8x128xf32> to vector<8x128xf32>
      %79 = arith.mulf %60, %78 : vector<8x128xf32>
      %80 = arith.addf %56, %79 : vector<8x128xf32>
      %c3 = arith.constant 3 : index
      %81 = arith.index_cast %arg3 : i32 to index
      %c0_39 = arith.constant 0 : index
      %c0_40 = arith.constant 0 : index
      %82 = vector.load %arg1[%c3, %81, %c0_39, %c0_40] : memref<82x2x8x128xf32, #tpu.memory_space<vmem>>, vector<1x1x8x128xf32>
      %83 = vector.shape_cast %82 : vector<1x1x8x128xf32> to vector<8x128xf32>
      %84 = arith.mulf %83, %3 : vector<8x128xf32>
      %c34 = arith.constant 34 : index
      %85 = arith.index_cast %arg3 : i32 to index
      %c0_41 = arith.constant 0 : index
      %c0_42 = arith.constant 0 : index
      %86 = vector.load %arg1[%c34, %85, %c0_41, %c0_42] : memref<82x2x8x128xf32, #tpu.memory_space<vmem>>, vector<1x1x8x128xf32>
      %87 = vector.shape_cast %86 : vector<1x1x8x128xf32> to vector<8x128xf32>
      %88 = arith.mulf %84, %87 : vector<8x128xf32>
      %89 = arith.addf %65, %88 : vector<8x128xf32>
      %c35 = arith.constant 35 : index
      %90 = arith.index_cast %arg3 : i32 to index
      %c0_43 = arith.constant 0 : index
      %c0_44 = arith.constant 0 : index
      %91 = vector.load %arg1[%c35, %90, %c0_43, %c0_44] : memref<82x2x8x128xf32, #tpu.memory_space<vmem>>, vector<1x1x8x128xf32>
      %92 = vector.shape_cast %91 : vector<1x1x8x128xf32> to vector<8x128xf32>
      %93 = arith.mulf %84, %92 : vector<8x128xf32>
      %94 = arith.addf %70, %93 : vector<8x128xf32>
      %c36 = arith.constant 36 : index
      %95 = arith.index_cast %arg3 : i32 to index
      %c0_45 = arith.constant 0 : index
      %c0_46 = arith.constant 0 : index
      %96 = vector.load %arg1[%c36, %95, %c0_45, %c0_46] : memref<82x2x8x128xf32, #tpu.memory_space<vmem>>, vector<1x1x8x128xf32>
      %97 = vector.shape_cast %96 : vector<1x1x8x128xf32> to vector<8x128xf32>
      %98 = arith.mulf %84, %97 : vector<8x128xf32>
      %99 = arith.addf %75, %98 : vector<8x128xf32>
      %c37 = arith.constant 37 : index
      %100 = arith.index_cast %arg3 : i32 to index
      %c0_47 = arith.constant 0 : index
      %c0_48 = arith.constant 0 : index
      %101 = vector.load %arg1[%c37, %100, %c0_47, %c0_48] : memref<82x2x8x128xf32, #tpu.memory_space<vmem>>, vector<1x1x8x128xf32>
      %102 = vector.shape_cast %101 : vector<1x1x8x128xf32> to vector<8x128xf32>
      %103 = arith.mulf %84, %102 : vector<8x128xf32>
      %104 = arith.addf %80, %103 : vector<8x128xf32>
      %c4 = arith.constant 4 : index
      %105 = arith.index_cast %arg3 : i32 to index
      %c0_49 = arith.constant 0 : index
      %c0_50 = arith.constant 0 : index
      %106 = vector.load %arg1[%c4, %105, %c0_49, %c0_50] : memref<82x2x8x128xf32, #tpu.memory_space<vmem>>, vector<1x1x8x128xf32>
      %107 = vector.shape_cast %106 : vector<1x1x8x128xf32> to vector<8x128xf32>
      %108 = arith.mulf %107, %6 : vector<8x128xf32>
      %c5 = arith.constant 5 : index
      %109 = arith.index_cast %arg3 : i32 to index
      %c0_51 = arith.constant 0 : index
      %c0_52 = arith.constant 0 : index
      %110 = vector.load %arg1[%c5, %109, %c0_51, %c0_52] : memref<82x2x8x128xf32, #tpu.memory_space<vmem>>, vector<1x1x8x128xf32>
      %111 = vector.shape_cast %110 : vector<1x1x8x128xf32> to vector<8x128xf32>
      %112 = arith.mulf %111, %9 : vector<8x128xf32>
      %113 = arith.addf %108, %112 : vector<8x128xf32>
      %c6 = arith.constant 6 : index
      %114 = arith.index_cast %arg3 : i32 to index
      %c0_53 = arith.constant 0 : index
      %c0_54 = arith.constant 0 : index
      %115 = vector.load %arg1[%c6, %114, %c0_53, %c0_54] : memref<82x2x8x128xf32, #tpu.memory_space<vmem>>, vector<1x1x8x128xf32>
      %116 = vector.shape_cast %115 : vector<1x1x8x128xf32> to vector<8x128xf32>
      %117 = arith.mulf %116, %12 : vector<8x128xf32>
      %118 = arith.addf %113, %117 : vector<8x128xf32>
      %cst = arith.constant 0.577350259 : f32
      %119 = vector.broadcast %cst : f32 to vector<8x128xf32>
      %120 = arith.mulf %118, %119 : vector<8x128xf32>
      %c38 = arith.constant 38 : index
      %121 = arith.index_cast %arg3 : i32 to index
      %c0_55 = arith.constant 0 : index
      %c0_56 = arith.constant 0 : index
      %122 = vector.load %arg1[%c38, %121, %c0_55, %c0_56] : memref<82x2x8x128xf32, #tpu.memory_space<vmem>>, vector<1x1x8x128xf32>
      %123 = vector.shape_cast %122 : vector<1x1x8x128xf32> to vector<8x128xf32>
      %124 = arith.mulf %120, %123 : vector<8x128xf32>
      %125 = arith.addf %89, %124 : vector<8x128xf32>
      %c39 = arith.constant 39 : index
      %126 = arith.index_cast %arg3 : i32 to index
      %c0_57 = arith.constant 0 : index
      %c0_58 = arith.constant 0 : index
      %127 = vector.load %arg1[%c39, %126, %c0_57, %c0_58] : memref<82x2x8x128xf32, #tpu.memory_space<vmem>>, vector<1x1x8x128xf32>
      %128 = vector.shape_cast %127 : vector<1x1x8x128xf32> to vector<8x128xf32>
      %129 = arith.mulf %120, %128 : vector<8x128xf32>
      %130 = arith.addf %94, %129 : vector<8x128xf32>
      %c40 = arith.constant 40 : index
      %131 = arith.index_cast %arg3 : i32 to index
      %c0_59 = arith.constant 0 : index
      %c0_60 = arith.constant 0 : index
      %132 = vector.load %arg1[%c40, %131, %c0_59, %c0_60] : memref<82x2x8x128xf32, #tpu.memory_space<vmem>>, vector<1x1x8x128xf32>
      %133 = vector.shape_cast %132 : vector<1x1x8x128xf32> to vector<8x128xf32>
      %134 = arith.mulf %120, %133 : vector<8x128xf32>
      %135 = arith.addf %99, %134 : vector<8x128xf32>
      %c41 = arith.constant 41 : index
      %136 = arith.index_cast %arg3 : i32 to index
      %c0_61 = arith.constant 0 : index
      %c0_62 = arith.constant 0 : index
      %137 = vector.load %arg1[%c41, %136, %c0_61, %c0_62] : memref<82x2x8x128xf32, #tpu.memory_space<vmem>>, vector<1x1x8x128xf32>
      %138 = vector.shape_cast %137 : vector<1x1x8x128xf32> to vector<8x128xf32>
      %139 = arith.mulf %120, %138 : vector<8x128xf32>
      %140 = arith.addf %104, %139 : vector<8x128xf32>
      %c7 = arith.constant 7 : index
      %141 = arith.index_cast %arg3 : i32 to index
      %c0_63 = arith.constant 0 : index
      %c0_64 = arith.constant 0 : index
      %142 = vector.load %arg1[%c7, %141, %c0_63, %c0_64] : memref<82x2x8x128xf32, #tpu.memory_space<vmem>>, vector<1x1x8x128xf32>
      %143 = vector.shape_cast %142 : vector<1x1x8x128xf32> to vector<8x128xf32>
      %144 = arith.mulf %143, %6 : vector<8x128xf32>
      %c8 = arith.constant 8 : index
      %145 = arith.index_cast %arg3 : i32 to index
      %c0_65 = arith.constant 0 : index
      %c0_66 = arith.constant 0 : index
      %146 = vector.load %arg1[%c8, %145, %c0_65, %c0_66] : memref<82x2x8x128xf32, #tpu.memory_space<vmem>>, vector<1x1x8x128xf32>
      %147 = vector.shape_cast %146 : vector<1x1x8x128xf32> to vector<8x128xf32>
      %148 = arith.mulf %147, %9 : vector<8x128xf32>
      %149 = arith.addf %144, %148 : vector<8x128xf32>
      %c9 = arith.constant 9 : index
      %150 = arith.index_cast %arg3 : i32 to index
      %c0_67 = arith.constant 0 : index
      %c0_68 = arith.constant 0 : index
      %151 = vector.load %arg1[%c9, %150, %c0_67, %c0_68] : memref<82x2x8x128xf32, #tpu.memory_space<vmem>>, vector<1x1x8x128xf32>
      %152 = vector.shape_cast %151 : vector<1x1x8x128xf32> to vector<8x128xf32>
      %153 = arith.mulf %152, %12 : vector<8x128xf32>
      %154 = arith.addf %149, %153 : vector<8x128xf32>
      %cst_69 = arith.constant 0.577350259 : f32
      %155 = vector.broadcast %cst_69 : f32 to vector<8x128xf32>
      %156 = arith.mulf %154, %155 : vector<8x128xf32>
      %c42 = arith.constant 42 : index
      %157 = arith.index_cast %arg3 : i32 to index
      %c0_70 = arith.constant 0 : index
      %c0_71 = arith.constant 0 : index
      %158 = vector.load %arg1[%c42, %157, %c0_70, %c0_71] : memref<82x2x8x128xf32, #tpu.memory_space<vmem>>, vector<1x1x8x128xf32>
      %159 = vector.shape_cast %158 : vector<1x1x8x128xf32> to vector<8x128xf32>
      %160 = arith.mulf %156, %159 : vector<8x128xf32>
      %161 = arith.addf %125, %160 : vector<8x128xf32>
      %c43 = arith.constant 43 : index
      %162 = arith.index_cast %arg3 : i32 to index
      %c0_72 = arith.constant 0 : index
      %c0_73 = arith.constant 0 : index
      %163 = vector.load %arg1[%c43, %162, %c0_72, %c0_73] : memref<82x2x8x128xf32, #tpu.memory_space<vmem>>, vector<1x1x8x128xf32>
      %164 = vector.shape_cast %163 : vector<1x1x8x128xf32> to vector<8x128xf32>
      %165 = arith.mulf %156, %164 : vector<8x128xf32>
      %166 = arith.addf %130, %165 : vector<8x128xf32>
      %c44 = arith.constant 44 : index
      %167 = arith.index_cast %arg3 : i32 to index
      %c0_74 = arith.constant 0 : index
      %c0_75 = arith.constant 0 : index
      %168 = vector.load %arg1[%c44, %167, %c0_74, %c0_75] : memref<82x2x8x128xf32, #tpu.memory_space<vmem>>, vector<1x1x8x128xf32>
      %169 = vector.shape_cast %168 : vector<1x1x8x128xf32> to vector<8x128xf32>
      %170 = arith.mulf %156, %169 : vector<8x128xf32>
      %171 = arith.addf %135, %170 : vector<8x128xf32>
      %c45 = arith.constant 45 : index
      %172 = arith.index_cast %arg3 : i32 to index
      %c0_76 = arith.constant 0 : index
      %c0_77 = arith.constant 0 : index
      %173 = vector.load %arg1[%c45, %172, %c0_76, %c0_77] : memref<82x2x8x128xf32, #tpu.memory_space<vmem>>, vector<1x1x8x128xf32>
      %174 = vector.shape_cast %173 : vector<1x1x8x128xf32> to vector<8x128xf32>
      %175 = arith.mulf %156, %174 : vector<8x128xf32>
      %176 = arith.addf %140, %175 : vector<8x128xf32>
      %cst_78 = arith.constant 0.408248305 : f32
      %177 = vector.broadcast %cst_78 : f32 to vector<8x128xf32>
      %178 = arith.mulf %161, %177 : vector<8x128xf32>
      %c0_79 = arith.constant 0 : index
      %179 = arith.index_cast %arg3 : i32 to index
      %c0_80 = arith.constant 0 : index
      %c0_81 = arith.constant 0 : index
      %180 = vector.load %arg2[%c0_79, %179, %c0_80, %c0_81] : memref<18x2x8x128xf32, #tpu.memory_space<vmem>>, vector<1x1x8x128xf32>
      %181 = vector.shape_cast %180 : vector<1x1x8x128xf32> to vector<8x128xf32>
      %182 = vector.shape_cast %178 : vector<8x128xf32> to vector<1x1x8x128xf32>
      tpu.vector_store %arg2[%c0_79, %179, %c0_80, %c0_81], %182 {strides = array<i32>} : memref<18x2x8x128xf32, #tpu.memory_space<vmem>>, vector<1x1x8x128xf32>,
      %cst_82 = arith.constant 0.408248305 : f32
      %183 = vector.broadcast %cst_82 : f32 to vector<8x128xf32>
      %184 = arith.mulf %166, %183 : vector<8x128xf32>
      %c1_83 = arith.constant 1 : index
      %185 = arith.index_cast %arg3 : i32 to index
      %c0_84 = arith.constant 0 : index
      %c0_85 = arith.constant 0 : index
      %186 = vector.load %arg2[%c1_83, %185, %c0_84, %c0_85] : memref<18x2x8x128xf32, #tpu.memory_space<vmem>>, vector<1x1x8x128xf32>
      %187 = vector.shape_cast %186 : vector<1x1x8x128xf32> to vector<8x128xf32>
      %188 = vector.shape_cast %184 : vector<8x128xf32> to vector<1x1x8x128xf32>
      tpu.vector_store %arg2[%c1_83, %185, %c0_84, %c0_85], %188 {strides = array<i32>} : memref<18x2x8x128xf32, #tpu.memory_space<vmem>>, vector<1x1x8x128xf32>,
      %cst_86 = arith.constant 0.408248305 : f32
      %189 = vector.broadcast %cst_86 : f32 to vector<8x128xf32>
      %190 = arith.mulf %171, %189 : vector<8x128xf32>
      %c2_87 = arith.constant 2 : index
      %191 = arith.index_cast %arg3 : i32 to index
      %c0_88 = arith.constant 0 : index
      %c0_89 = arith.constant 0 : index
      %192 = vector.load %arg2[%c2_87, %191, %c0_88, %c0_89] : memref<18x2x8x128xf32, #tpu.memory_space<vmem>>, vector<1x1x8x128xf32>
      %193 = vector.shape_cast %192 : vector<1x1x8x128xf32> to vector<8x128xf32>
      %194 = vector.shape_cast %190 : vector<8x128xf32> to vector<1x1x8x128xf32>
      tpu.vector_store %arg2[%c2_87, %191, %c0_88, %c0_89], %194 {strides = array<i32>} : memref<18x2x8x128xf32, #tpu.memory_space<vmem>>, vector<1x1x8x128xf32>,
      %cst_90 = arith.constant 0.408248305 : f32
      %195 = vector.broadcast %cst_90 : f32 to vector<8x128xf32>
      %196 = arith.mulf %176, %195 : vector<8x128xf32>
      %c3_91 = arith.constant 3 : index
      %197 = arith.index_cast %arg3 : i32 to index
      %c0_92 = arith.constant 0 : index
      %c0_93 = arith.constant 0 : index
      %198 = vector.load %arg2[%c3_91, %197, %c0_92, %c0_93] : memref<18x2x8x128xf32, #tpu.memory_space<vmem>>, vector<1x1x8x128xf32>
      %199 = vector.shape_cast %198 : vector<1x1x8x128xf32> to vector<8x128xf32>
      %200 = vector.shape_cast %196 : vector<8x128xf32> to vector<1x1x8x128xf32>
      tpu.vector_store %arg2[%c3_91, %197, %c0_92, %c0_93], %200 {strides = array<i32>} : memref<18x2x8x128xf32, #tpu.memory_space<vmem>>, vector<1x1x8x128xf32>,
      %c0_94 = arith.constant 0 : index
      %201 = arith.index_cast %arg3 : i32 to index
      %c0_95 = arith.constant 0 : index
      %c0_96 = arith.constant 0 : index
      %202 = vector.load %arg1[%c0_94, %201, %c0_95, %c0_96] : memref<82x2x8x128xf32, #tpu.memory_space<vmem>>, vector<1x1x8x128xf32>
      %203 = vector.shape_cast %202 : vector<1x1x8x128xf32> to vector<8x128xf32>
      %204 = arith.mulf %203, %6 : vector<8x128xf32>
      %205 = arith.mulf %203, %9 : vector<8x128xf32>
      %206 = arith.mulf %203, %12 : vector<8x128xf32>
      %c46 = arith.constant 46 : index
      %207 = arith.index_cast %arg3 : i32 to index
      %c0_97 = arith.constant 0 : index
      %c0_98 = arith.constant 0 : index
      %208 = vector.load %arg1[%c46, %207, %c0_97, %c0_98] : memref<82x2x8x128xf32, #tpu.memory_space<vmem>>, vector<1x1x8x128xf32>
      %209 = vector.shape_cast %208 : vector<1x1x8x128xf32> to vector<8x128xf32>
      %210 = arith.mulf %204, %209 : vector<8x128xf32>
      %211 = arith.mulf %205, %209 : vector<8x128xf32>
      %212 = arith.mulf %206, %209 : vector<8x128xf32>
      %c47 = arith.constant 47 : index
      %213 = arith.index_cast %arg3 : i32 to index
      %c0_99 = arith.constant 0 : index
      %c0_100 = arith.constant 0 : index
      %214 = vector.load %arg1[%c47, %213, %c0_99, %c0_100] : memref<82x2x8x128xf32, #tpu.memory_space<vmem>>, vector<1x1x8x128xf32>
      %215 = vector.shape_cast %214 : vector<1x1x8x128xf32> to vector<8x128xf32>
      %216 = arith.mulf %204, %215 : vector<8x128xf32>
      %217 = arith.mulf %205, %215 : vector<8x128xf32>
      %218 = arith.mulf %206, %215 : vector<8x128xf32>
      %c1_101 = arith.constant 1 : index
      %219 = arith.index_cast %arg3 : i32 to index
      %c0_102 = arith.constant 0 : index
      %c0_103 = arith.constant 0 : index
      %220 = vector.load %arg1[%c1_101, %219, %c0_102, %c0_103] : memref<82x2x8x128xf32, #tpu.memory_space<vmem>>, vector<1x1x8x128xf32>
      %221 = vector.shape_cast %220 : vector<1x1x8x128xf32> to vector<8x128xf32>
      %222 = arith.mulf %221, %6 : vector<8x128xf32>
      %223 = arith.mulf %221, %9 : vector<8x128xf32>
      %224 = arith.mulf %221, %12 : vector<8x128xf32>
      %c48 = arith.constant 48 : index
      %225 = arith.index_cast %arg3 : i32 to index
      %c0_104 = arith.constant 0 : index
      %c0_105 = arith.constant 0 : index
      %226 = vector.load %arg1[%c48, %225, %c0_104, %c0_105] : memref<82x2x8x128xf32, #tpu.memory_space<vmem>>, vector<1x1x8x128xf32>
      %227 = vector.shape_cast %226 : vector<1x1x8x128xf32> to vector<8x128xf32>
      %228 = arith.mulf %222, %227 : vector<8x128xf32>
      %229 = arith.addf %210, %228 : vector<8x128xf32>
      %230 = arith.mulf %223, %227 : vector<8x128xf32>
      %231 = arith.addf %211, %230 : vector<8x128xf32>
      %232 = arith.mulf %224, %227 : vector<8x128xf32>
      %233 = arith.addf %212, %232 : vector<8x128xf32>
      %c49 = arith.constant 49 : index
      %234 = arith.index_cast %arg3 : i32 to index
      %c0_106 = arith.constant 0 : index
      %c0_107 = arith.constant 0 : index
      %235 = vector.load %arg1[%c49, %234, %c0_106, %c0_107] : memref<82x2x8x128xf32, #tpu.memory_space<vmem>>, vector<1x1x8x128xf32>
      %236 = vector.shape_cast %235 : vector<1x1x8x128xf32> to vector<8x128xf32>
      %237 = arith.mulf %222, %236 : vector<8x128xf32>
      %238 = arith.addf %216, %237 : vector<8x128xf32>
      %239 = arith.mulf %223, %236 : vector<8x128xf32>
      %240 = arith.addf %217, %239 : vector<8x128xf32>
      %241 = arith.mulf %224, %236 : vector<8x128xf32>
      %242 = arith.addf %218, %241 : vector<8x128xf32>
      %c2_108 = arith.constant 2 : index
      %243 = arith.index_cast %arg3 : i32 to index
      %c0_109 = arith.constant 0 : index
      %c0_110 = arith.constant 0 : index
      %244 = vector.load %arg1[%c2_108, %243, %c0_109, %c0_110] : memref<82x2x8x128xf32, #tpu.memory_space<vmem>>, vector<1x1x8x128xf32>
      %245 = vector.shape_cast %244 : vector<1x1x8x128xf32> to vector<8x128xf32>
      %246 = arith.mulf %245, %6 : vector<8x128xf32>
      %247 = arith.mulf %245, %9 : vector<8x128xf32>
      %248 = arith.mulf %245, %12 : vector<8x128xf32>
      %c50 = arith.constant 50 : index
      %249 = arith.index_cast %arg3 : i32 to index
      %c0_111 = arith.constant 0 : index
      %c0_112 = arith.constant 0 : index
      %250 = vector.load %arg1[%c50, %249, %c0_111, %c0_112] : memref<82x2x8x128xf32, #tpu.memory_space<vmem>>, vector<1x1x8x128xf32>
      %251 = vector.shape_cast %250 : vector<1x1x8x128xf32> to vector<8x128xf32>
      %252 = arith.mulf %246, %251 : vector<8x128xf32>
      %253 = arith.addf %229, %252 : vector<8x128xf32>
      %254 = arith.mulf %247, %251 : vector<8x128xf32>
      %255 = arith.addf %231, %254 : vector<8x128xf32>
      %256 = arith.mulf %248, %251 : vector<8x128xf32>
      %257 = arith.addf %233, %256 : vector<8x128xf32>
      %c51 = arith.constant 51 : index
      %258 = arith.index_cast %arg3 : i32 to index
      %c0_113 = arith.constant 0 : index
      %c0_114 = arith.constant 0 : index
      %259 = vector.load %arg1[%c51, %258, %c0_113, %c0_114] : memref<82x2x8x128xf32, #tpu.memory_space<vmem>>, vector<1x1x8x128xf32>
      %260 = vector.shape_cast %259 : vector<1x1x8x128xf32> to vector<8x128xf32>
      %261 = arith.mulf %246, %260 : vector<8x128xf32>
      %262 = arith.addf %238, %261 : vector<8x128xf32>
      %263 = arith.mulf %247, %260 : vector<8x128xf32>
      %264 = arith.addf %240, %263 : vector<8x128xf32>
      %265 = arith.mulf %248, %260 : vector<8x128xf32>
      %266 = arith.addf %242, %265 : vector<8x128xf32>
      %c3_115 = arith.constant 3 : index
      %267 = arith.index_cast %arg3 : i32 to index
      %c0_116 = arith.constant 0 : index
      %c0_117 = arith.constant 0 : index
      %268 = vector.load %arg1[%c3_115, %267, %c0_116, %c0_117] : memref<82x2x8x128xf32, #tpu.memory_space<vmem>>, vector<1x1x8x128xf32>
      %269 = vector.shape_cast %268 : vector<1x1x8x128xf32> to vector<8x128xf32>
      %270 = arith.mulf %269, %6 : vector<8x128xf32>
      %271 = arith.mulf %269, %9 : vector<8x128xf32>
      %272 = arith.mulf %269, %12 : vector<8x128xf32>
      %c52 = arith.constant 52 : index
      %273 = arith.index_cast %arg3 : i32 to index
      %c0_118 = arith.constant 0 : index
      %c0_119 = arith.constant 0 : index
      %274 = vector.load %arg1[%c52, %273, %c0_118, %c0_119] : memref<82x2x8x128xf32, #tpu.memory_space<vmem>>, vector<1x1x8x128xf32>
      %275 = vector.shape_cast %274 : vector<1x1x8x128xf32> to vector<8x128xf32>
      %276 = arith.mulf %270, %275 : vector<8x128xf32>
      %277 = arith.addf %253, %276 : vector<8x128xf32>
      %278 = arith.mulf %271, %275 : vector<8x128xf32>
      %279 = arith.addf %255, %278 : vector<8x128xf32>
      %280 = arith.mulf %272, %275 : vector<8x128xf32>
      %281 = arith.addf %257, %280 : vector<8x128xf32>
      %c53 = arith.constant 53 : index
      %282 = arith.index_cast %arg3 : i32 to index
      %c0_120 = arith.constant 0 : index
      %c0_121 = arith.constant 0 : index
      %283 = vector.load %arg1[%c53, %282, %c0_120, %c0_121] : memref<82x2x8x128xf32, #tpu.memory_space<vmem>>, vector<1x1x8x128xf32>
      %284 = vector.shape_cast %283 : vector<1x1x8x128xf32> to vector<8x128xf32>
      %285 = arith.mulf %270, %284 : vector<8x128xf32>
      %286 = arith.addf %262, %285 : vector<8x128xf32>
      %287 = arith.mulf %271, %284 : vector<8x128xf32>
      %288 = arith.addf %264, %287 : vector<8x128xf32>
      %289 = arith.mulf %272, %284 : vector<8x128xf32>
      %290 = arith.addf %266, %289 : vector<8x128xf32>
      %c4_122 = arith.constant 4 : index
      %291 = arith.index_cast %arg3 : i32 to index
      %c0_123 = arith.constant 0 : index
      %c0_124 = arith.constant 0 : index
      %292 = vector.load %arg1[%c4_122, %291, %c0_123, %c0_124] : memref<82x2x8x128xf32, #tpu.memory_space<vmem>>, vector<1x1x8x128xf32>
      %293 = vector.shape_cast %292 : vector<1x1x8x128xf32> to vector<8x128xf32>
      %294 = arith.mulf %293, %3 : vector<8x128xf32>
      %c5_125 = arith.constant 5 : index
      %295 = arith.index_cast %arg3 : i32 to index
      %c0_126 = arith.constant 0 : index
      %c0_127 = arith.constant 0 : index
      %296 = vector.load %arg1[%c5_125, %295, %c0_126, %c0_127] : memref<82x2x8x128xf32, #tpu.memory_space<vmem>>, vector<1x1x8x128xf32>
      %297 = vector.shape_cast %296 : vector<1x1x8x128xf32> to vector<8x128xf32>
      %298 = arith.mulf %297, %3 : vector<8x128xf32>
      %c6_128 = arith.constant 6 : index
      %299 = arith.index_cast %arg3 : i32 to index
      %c0_129 = arith.constant 0 : index
      %c0_130 = arith.constant 0 : index
      %300 = vector.load %arg1[%c6_128, %299, %c0_129, %c0_130] : memref<82x2x8x128xf32, #tpu.memory_space<vmem>>, vector<1x1x8x128xf32>
      %301 = vector.shape_cast %300 : vector<1x1x8x128xf32> to vector<8x128xf32>
      %302 = arith.mulf %301, %3 : vector<8x128xf32>
      %c54 = arith.constant 54 : index
      %303 = arith.index_cast %arg3 : i32 to index
      %c0_131 = arith.constant 0 : index
      %c0_132 = arith.constant 0 : index
      %304 = vector.load %arg1[%c54, %303, %c0_131, %c0_132] : memref<82x2x8x128xf32, #tpu.memory_space<vmem>>, vector<1x1x8x128xf32>
      %305 = vector.shape_cast %304 : vector<1x1x8x128xf32> to vector<8x128xf32>
      %306 = arith.mulf %294, %305 : vector<8x128xf32>
      %307 = arith.addf %277, %306 : vector<8x128xf32>
      %308 = arith.mulf %298, %305 : vector<8x128xf32>
      %309 = arith.addf %279, %308 : vector<8x128xf32>
      %310 = arith.mulf %302, %305 : vector<8x128xf32>
      %311 = arith.addf %281, %310 : vector<8x128xf32>
      %c55 = arith.constant 55 : index
      %312 = arith.index_cast %arg3 : i32 to index
      %c0_133 = arith.constant 0 : index
      %c0_134 = arith.constant 0 : index
      %313 = vector.load %arg1[%c55, %312, %c0_133, %c0_134] : memref<82x2x8x128xf32, #tpu.memory_space<vmem>>, vector<1x1x8x128xf32>
      %314 = vector.shape_cast %313 : vector<1x1x8x128xf32> to vector<8x128xf32>
      %315 = arith.mulf %294, %314 : vector<8x128xf32>
      %316 = arith.addf %286, %315 : vector<8x128xf32>
      %317 = arith.mulf %298, %314 : vector<8x128xf32>
      %318 = arith.addf %288, %317 : vector<8x128xf32>
      %319 = arith.mulf %302, %314 : vector<8x128xf32>
      %320 = arith.addf %290, %319 : vector<8x128xf32>
      %c7_135 = arith.constant 7 : index
      %321 = arith.index_cast %arg3 : i32 to index
      %c0_136 = arith.constant 0 : index
      %c0_137 = arith.constant 0 : index
      %322 = vector.load %arg1[%c7_135, %321, %c0_136, %c0_137] : memref<82x2x8x128xf32, #tpu.memory_space<vmem>>, vector<1x1x8x128xf32>
      %323 = vector.shape_cast %322 : vector<1x1x8x128xf32> to vector<8x128xf32>
      %324 = arith.mulf %323, %3 : vector<8x128xf32>
      %c8_138 = arith.constant 8 : index
      %325 = arith.index_cast %arg3 : i32 to index
      %c0_139 = arith.constant 0 : index
      %c0_140 = arith.constant 0 : index
      %326 = vector.load %arg1[%c8_138, %325, %c0_139, %c0_140] : memref<82x2x8x128xf32, #tpu.memory_space<vmem>>, vector<1x1x8x128xf32>
      %327 = vector.shape_cast %326 : vector<1x1x8x128xf32> to vector<8x128xf32>
      %328 = arith.mulf %327, %3 : vector<8x128xf32>
      %c9_141 = arith.constant 9 : index
      %329 = arith.index_cast %arg3 : i32 to index
      %c0_142 = arith.constant 0 : index
      %c0_143 = arith.constant 0 : index
      %330 = vector.load %arg1[%c9_141, %329, %c0_142, %c0_143] : memref<82x2x8x128xf32, #tpu.memory_space<vmem>>, vector<1x1x8x128xf32>
      %331 = vector.shape_cast %330 : vector<1x1x8x128xf32> to vector<8x128xf32>
      %332 = arith.mulf %331, %3 : vector<8x128xf32>
      %c56 = arith.constant 56 : index
      %333 = arith.index_cast %arg3 : i32 to index
      %c0_144 = arith.constant 0 : index
      %c0_145 = arith.constant 0 : index
      %334 = vector.load %arg1[%c56, %333, %c0_144, %c0_145] : memref<82x2x8x128xf32, #tpu.memory_space<vmem>>, vector<1x1x8x128xf32>
      %335 = vector.shape_cast %334 : vector<1x1x8x128xf32> to vector<8x128xf32>
      %336 = arith.mulf %324, %335 : vector<8x128xf32>
      %337 = arith.addf %307, %336 : vector<8x128xf32>
      %338 = arith.mulf %328, %335 : vector<8x128xf32>
      %339 = arith.addf %309, %338 : vector<8x128xf32>
      %340 = arith.mulf %332, %335 : vector<8x128xf32>
      %341 = arith.addf %311, %340 : vector<8x128xf32>
      %c57 = arith.constant 57 : index
      %342 = arith.index_cast %arg3 : i32 to index
      %c0_146 = arith.constant 0 : index
      %c0_147 = arith.constant 0 : index
      %343 = vector.load %arg1[%c57, %342, %c0_146, %c0_147] : memref<82x2x8x128xf32, #tpu.memory_space<vmem>>, vector<1x1x8x128xf32>
      %344 = vector.shape_cast %343 : vector<1x1x8x128xf32> to vector<8x128xf32>
      %345 = arith.mulf %324, %344 : vector<8x128xf32>
      %346 = arith.addf %316, %345 : vector<8x128xf32>
      %347 = arith.mulf %328, %344 : vector<8x128xf32>
      %348 = arith.addf %318, %347 : vector<8x128xf32>
      %349 = arith.mulf %332, %344 : vector<8x128xf32>
      %350 = arith.addf %320, %349 : vector<8x128xf32>
      %c10 = arith.constant 10 : index
      %351 = arith.index_cast %arg3 : i32 to index
      %c0_148 = arith.constant 0 : index
      %c0_149 = arith.constant 0 : index
      %352 = vector.load %arg1[%c10, %351, %c0_148, %c0_149] : memref<82x2x8x128xf32, #tpu.memory_space<vmem>>, vector<1x1x8x128xf32>
      %353 = vector.shape_cast %352 : vector<1x1x8x128xf32> to vector<8x128xf32>
      %c11 = arith.constant 11 : index
      %354 = arith.index_cast %arg3 : i32 to index
      %c0_150 = arith.constant 0 : index
      %c0_151 = arith.constant 0 : index
      %355 = vector.load %arg1[%c11, %354, %c0_150, %c0_151] : memref<82x2x8x128xf32, #tpu.memory_space<vmem>>, vector<1x1x8x128xf32>
      %356 = vector.shape_cast %355 : vector<1x1x8x128xf32> to vector<8x128xf32>
      %c12 = arith.constant 12 : index
      %357 = arith.index_cast %arg3 : i32 to index
      %c0_152 = arith.constant 0 : index
      %c0_153 = arith.constant 0 : index
      %358 = vector.load %arg1[%c12, %357, %c0_152, %c0_153] : memref<82x2x8x128xf32, #tpu.memory_space<vmem>>, vector<1x1x8x128xf32>
      %359 = vector.shape_cast %358 : vector<1x1x8x128xf32> to vector<8x128xf32>
      %360 = arith.mulf %356, %12 : vector<8x128xf32>
      %361 = arith.mulf %359, %9 : vector<8x128xf32>
      %362 = arith.subf %360, %361 : vector<8x128xf32>
      %363 = arith.mulf %359, %6 : vector<8x128xf32>
      %364 = arith.mulf %353, %12 : vector<8x128xf32>
      %365 = arith.subf %363, %364 : vector<8x128xf32>
      %366 = arith.mulf %353, %9 : vector<8x128xf32>
      %367 = arith.mulf %356, %6 : vector<8x128xf32>
      %368 = arith.subf %366, %367 : vector<8x128xf32>
      %cst_154 = arith.constant 0.707106769 : f32
      %369 = vector.broadcast %cst_154 : f32 to vector<8x128xf32>
      %370 = arith.mulf %362, %369 : vector<8x128xf32>
      %cst_155 = arith.constant 0.707106769 : f32
      %371 = vector.broadcast %cst_155 : f32 to vector<8x128xf32>
      %372 = arith.mulf %365, %371 : vector<8x128xf32>
      %cst_156 = arith.constant 0.707106769 : f32
      %373 = vector.broadcast %cst_156 : f32 to vector<8x128xf32>
      %374 = arith.mulf %368, %373 : vector<8x128xf32>
      %c58 = arith.constant 58 : index
      %375 = arith.index_cast %arg3 : i32 to index
      %c0_157 = arith.constant 0 : index
      %c0_158 = arith.constant 0 : index
      %376 = vector.load %arg1[%c58, %375, %c0_157, %c0_158] : memref<82x2x8x128xf32, #tpu.memory_space<vmem>>, vector<1x1x8x128xf32>
      %377 = vector.shape_cast %376 : vector<1x1x8x128xf32> to vector<8x128xf32>
      %378 = arith.mulf %370, %377 : vector<8x128xf32>
      %379 = arith.addf %337, %378 : vector<8x128xf32>
      %380 = arith.mulf %372, %377 : vector<8x128xf32>
      %381 = arith.addf %339, %380 : vector<8x128xf32>
      %382 = arith.mulf %374, %377 : vector<8x128xf32>
      %383 = arith.addf %341, %382 : vector<8x128xf32>
      %c59 = arith.constant 59 : index
      %384 = arith.index_cast %arg3 : i32 to index
      %c0_159 = arith.constant 0 : index
      %c0_160 = arith.constant 0 : index
      %385 = vector.load %arg1[%c59, %384, %c0_159, %c0_160] : memref<82x2x8x128xf32, #tpu.memory_space<vmem>>, vector<1x1x8x128xf32>
      %386 = vector.shape_cast %385 : vector<1x1x8x128xf32> to vector<8x128xf32>
      %387 = arith.mulf %370, %386 : vector<8x128xf32>
      %388 = arith.addf %346, %387 : vector<8x128xf32>
      %389 = arith.mulf %372, %386 : vector<8x128xf32>
      %390 = arith.addf %348, %389 : vector<8x128xf32>
      %391 = arith.mulf %374, %386 : vector<8x128xf32>
      %392 = arith.addf %350, %391 : vector<8x128xf32>
      %c13 = arith.constant 13 : index
      %393 = arith.index_cast %arg3 : i32 to index
      %c0_161 = arith.constant 0 : index
      %c0_162 = arith.constant 0 : index
      %394 = vector.load %arg1[%c13, %393, %c0_161, %c0_162] : memref<82x2x8x128xf32, #tpu.memory_space<vmem>>, vector<1x1x8x128xf32>
      %395 = vector.shape_cast %394 : vector<1x1x8x128xf32> to vector<8x128xf32>
      %c14 = arith.constant 14 : index
      %396 = arith.index_cast %arg3 : i32 to index
      %c0_163 = arith.constant 0 : index
      %c0_164 = arith.constant 0 : index
      %397 = vector.load %arg1[%c14, %396, %c0_163, %c0_164] : memref<82x2x8x128xf32, #tpu.memory_space<vmem>>, vector<1x1x8x128xf32>
      %398 = vector.shape_cast %397 : vector<1x1x8x128xf32> to vector<8x128xf32>
      %c15 = arith.constant 15 : index
      %399 = arith.index_cast %arg3 : i32 to index
      %c0_165 = arith.constant 0 : index
      %c0_166 = arith.constant 0 : index
      %400 = vector.load %arg1[%c15, %399, %c0_165, %c0_166] : memref<82x2x8x128xf32, #tpu.memory_space<vmem>>, vector<1x1x8x128xf32>
      %401 = vector.shape_cast %400 : vector<1x1x8x128xf32> to vector<8x128xf32>
      %402 = arith.mulf %398, %12 : vector<8x128xf32>
      %403 = arith.mulf %401, %9 : vector<8x128xf32>
      %404 = arith.subf %402, %403 : vector<8x128xf32>
      %405 = arith.mulf %401, %6 : vector<8x128xf32>
      %406 = arith.mulf %395, %12 : vector<8x128xf32>
      %407 = arith.subf %405, %406 : vector<8x128xf32>
      %408 = arith.mulf %395, %9 : vector<8x128xf32>
      %409 = arith.mulf %398, %6 : vector<8x128xf32>
      %410 = arith.subf %408, %409 : vector<8x128xf32>
      %cst_167 = arith.constant 0.707106769 : f32
      %411 = vector.broadcast %cst_167 : f32 to vector<8x128xf32>
      %412 = arith.mulf %404, %411 : vector<8x128xf32>
      %cst_168 = arith.constant 0.707106769 : f32
      %413 = vector.broadcast %cst_168 : f32 to vector<8x128xf32>
      %414 = arith.mulf %407, %413 : vector<8x128xf32>
      %cst_169 = arith.constant 0.707106769 : f32
      %415 = vector.broadcast %cst_169 : f32 to vector<8x128xf32>
      %416 = arith.mulf %410, %415 : vector<8x128xf32>
      %c60 = arith.constant 60 : index
      %417 = arith.index_cast %arg3 : i32 to index
      %c0_170 = arith.constant 0 : index
      %c0_171 = arith.constant 0 : index
      %418 = vector.load %arg1[%c60, %417, %c0_170, %c0_171] : memref<82x2x8x128xf32, #tpu.memory_space<vmem>>, vector<1x1x8x128xf32>
      %419 = vector.shape_cast %418 : vector<1x1x8x128xf32> to vector<8x128xf32>
      %420 = arith.mulf %412, %419 : vector<8x128xf32>
      %421 = arith.addf %379, %420 : vector<8x128xf32>
      %422 = arith.mulf %414, %419 : vector<8x128xf32>
      %423 = arith.addf %381, %422 : vector<8x128xf32>
      %424 = arith.mulf %416, %419 : vector<8x128xf32>
      %425 = arith.addf %383, %424 : vector<8x128xf32>
      %c61 = arith.constant 61 : index
      %426 = arith.index_cast %arg3 : i32 to index
      %c0_172 = arith.constant 0 : index
      %c0_173 = arith.constant 0 : index
      %427 = vector.load %arg1[%c61, %426, %c0_172, %c0_173] : memref<82x2x8x128xf32, #tpu.memory_space<vmem>>, vector<1x1x8x128xf32>
      %428 = vector.shape_cast %427 : vector<1x1x8x128xf32> to vector<8x128xf32>
      %429 = arith.mulf %412, %428 : vector<8x128xf32>
      %430 = arith.addf %388, %429 : vector<8x128xf32>
      %431 = arith.mulf %414, %428 : vector<8x128xf32>
      %432 = arith.addf %390, %431 : vector<8x128xf32>
      %433 = arith.mulf %416, %428 : vector<8x128xf32>
      %434 = arith.addf %392, %433 : vector<8x128xf32>
      %cst_174 = arith.constant 0.353553385 : f32
      %435 = vector.broadcast %cst_174 : f32 to vector<8x128xf32>
      %436 = arith.mulf %421, %435 : vector<8x128xf32>
      %c4_175 = arith.constant 4 : index
      %437 = arith.index_cast %arg3 : i32 to index
      %c0_176 = arith.constant 0 : index
      %c0_177 = arith.constant 0 : index
      %438 = vector.load %arg2[%c4_175, %437, %c0_176, %c0_177] : memref<18x2x8x128xf32, #tpu.memory_space<vmem>>, vector<1x1x8x128xf32>
      %439 = vector.shape_cast %438 : vector<1x1x8x128xf32> to vector<8x128xf32>
      %440 = vector.shape_cast %436 : vector<8x128xf32> to vector<1x1x8x128xf32>
      tpu.vector_store %arg2[%c4_175, %437, %c0_176, %c0_177], %440 {strides = array<i32>} : memref<18x2x8x128xf32, #tpu.memory_space<vmem>>, vector<1x1x8x128xf32>,
      %cst_178 = arith.constant 0.353553385 : f32
      %441 = vector.broadcast %cst_178 : f32 to vector<8x128xf32>
      %442 = arith.mulf %423, %441 : vector<8x128xf32>
      %c5_179 = arith.constant 5 : index
      %443 = arith.index_cast %arg3 : i32 to index
      %c0_180 = arith.constant 0 : index
      %c0_181 = arith.constant 0 : index
      %444 = vector.load %arg2[%c5_179, %443, %c0_180, %c0_181] : memref<18x2x8x128xf32, #tpu.memory_space<vmem>>, vector<1x1x8x128xf32>
      %445 = vector.shape_cast %444 : vector<1x1x8x128xf32> to vector<8x128xf32>
      %446 = vector.shape_cast %442 : vector<8x128xf32> to vector<1x1x8x128xf32>
      tpu.vector_store %arg2[%c5_179, %443, %c0_180, %c0_181], %446 {strides = array<i32>} : memref<18x2x8x128xf32, #tpu.memory_space<vmem>>, vector<1x1x8x128xf32>,
      %cst_182 = arith.constant 0.353553385 : f32
      %447 = vector.broadcast %cst_182 : f32 to vector<8x128xf32>
      %448 = arith.mulf %425, %447 : vector<8x128xf32>
      %c6_183 = arith.constant 6 : index
      %449 = arith.index_cast %arg3 : i32 to index
      %c0_184 = arith.constant 0 : index
      %c0_185 = arith.constant 0 : index
      %450 = vector.load %arg2[%c6_183, %449, %c0_184, %c0_185] : memref<18x2x8x128xf32, #tpu.memory_space<vmem>>, vector<1x1x8x128xf32>
      %451 = vector.shape_cast %450 : vector<1x1x8x128xf32> to vector<8x128xf32>
      %452 = vector.shape_cast %448 : vector<8x128xf32> to vector<1x1x8x128xf32>
      tpu.vector_store %arg2[%c6_183, %449, %c0_184, %c0_185], %452 {strides = array<i32>} : memref<18x2x8x128xf32, #tpu.memory_space<vmem>>, vector<1x1x8x128xf32>,
      %cst_186 = arith.constant 0.353553385 : f32
      %453 = vector.broadcast %cst_186 : f32 to vector<8x128xf32>
      %454 = arith.mulf %430, %453 : vector<8x128xf32>
      %c7_187 = arith.constant 7 : index
      %455 = arith.index_cast %arg3 : i32 to index
      %c0_188 = arith.constant 0 : index
      %c0_189 = arith.constant 0 : index
      %456 = vector.load %arg2[%c7_187, %455, %c0_188, %c0_189] : memref<18x2x8x128xf32, #tpu.memory_space<vmem>>, vector<1x1x8x128xf32>
      %457 = vector.shape_cast %456 : vector<1x1x8x128xf32> to vector<8x128xf32>
      %458 = vector.shape_cast %454 : vector<8x128xf32> to vector<1x1x8x128xf32>
      tpu.vector_store %arg2[%c7_187, %455, %c0_188, %c0_189], %458 {strides = array<i32>} : memref<18x2x8x128xf32, #tpu.memory_space<vmem>>, vector<1x1x8x128xf32>,
      %cst_190 = arith.constant 0.353553385 : f32
      %459 = vector.broadcast %cst_190 : f32 to vector<8x128xf32>
      %460 = arith.mulf %432, %459 : vector<8x128xf32>
      %c8_191 = arith.constant 8 : index
      %461 = arith.index_cast %arg3 : i32 to index
      %c0_192 = arith.constant 0 : index
      %c0_193 = arith.constant 0 : index
      %462 = vector.load %arg2[%c8_191, %461, %c0_192, %c0_193] : memref<18x2x8x128xf32, #tpu.memory_space<vmem>>, vector<1x1x8x128xf32>
      %463 = vector.shape_cast %462 : vector<1x1x8x128xf32> to vector<8x128xf32>
      %464 = vector.shape_cast %460 : vector<8x128xf32> to vector<1x1x8x128xf32>
      tpu.vector_store %arg2[%c8_191, %461, %c0_192, %c0_193], %464 {strides = array<i32>} : memref<18x2x8x128xf32, #tpu.memory_space<vmem>>, vector<1x1x8x128xf32>,
      %cst_194 = arith.constant 0.353553385 : f32
      %465 = vector.broadcast %cst_194 : f32 to vector<8x128xf32>
      %466 = arith.mulf %434, %465 : vector<8x128xf32>
      %c9_195 = arith.constant 9 : index
      %467 = arith.index_cast %arg3 : i32 to index
      %c0_196 = arith.constant 0 : index
      %c0_197 = arith.constant 0 : index
      %468 = vector.load %arg2[%c9_195, %467, %c0_196, %c0_197] : memref<18x2x8x128xf32, #tpu.memory_space<vmem>>, vector<1x1x8x128xf32>
      %469 = vector.shape_cast %468 : vector<1x1x8x128xf32> to vector<8x128xf32>
      %470 = vector.shape_cast %466 : vector<8x128xf32> to vector<1x1x8x128xf32>
      tpu.vector_store %arg2[%c9_195, %467, %c0_196, %c0_197], %470 {strides = array<i32>} : memref<18x2x8x128xf32, #tpu.memory_space<vmem>>, vector<1x1x8x128xf32>,
      %c4_198 = arith.constant 4 : index
      %471 = arith.index_cast %arg3 : i32 to index
      %c0_199 = arith.constant 0 : index
      %c0_200 = arith.constant 0 : index
      %472 = vector.load %arg1[%c4_198, %471, %c0_199, %c0_200] : memref<82x2x8x128xf32, #tpu.memory_space<vmem>>, vector<1x1x8x128xf32>
      %473 = vector.shape_cast %472 : vector<1x1x8x128xf32> to vector<8x128xf32>
      %c5_201 = arith.constant 5 : index
      %474 = arith.index_cast %arg3 : i32 to index
      %c0_202 = arith.constant 0 : index
      %c0_203 = arith.constant 0 : index
      %475 = vector.load %arg1[%c5_201, %474, %c0_202, %c0_203] : memref<82x2x8x128xf32, #tpu.memory_space<vmem>>, vector<1x1x8x128xf32>
      %476 = vector.shape_cast %475 : vector<1x1x8x128xf32> to vector<8x128xf32>
      %c6_204 = arith.constant 6 : index
      %477 = arith.index_cast %arg3 : i32 to index
      %c0_205 = arith.constant 0 : index
      %c0_206 = arith.constant 0 : index
      %478 = vector.load %arg1[%c6_204, %477, %c0_205, %c0_206] : memref<82x2x8x128xf32, #tpu.memory_space<vmem>>, vector<1x1x8x128xf32>
      %479 = vector.shape_cast %478 : vector<1x1x8x128xf32> to vector<8x128xf32>
      %480 = arith.mulf %476, %12 : vector<8x128xf32>
      %481 = arith.mulf %479, %9 : vector<8x128xf32>
      %482 = arith.subf %480, %481 : vector<8x128xf32>
      %483 = arith.mulf %479, %6 : vector<8x128xf32>
      %484 = arith.mulf %473, %12 : vector<8x128xf32>
      %485 = arith.subf %483, %484 : vector<8x128xf32>
      %486 = arith.mulf %473, %9 : vector<8x128xf32>
      %487 = arith.mulf %476, %6 : vector<8x128xf32>
      %488 = arith.subf %486, %487 : vector<8x128xf32>
      %cst_207 = arith.constant 0.707106769 : f32
      %489 = vector.broadcast %cst_207 : f32 to vector<8x128xf32>
      %490 = arith.mulf %482, %489 : vector<8x128xf32>
      %cst_208 = arith.constant 0.707106769 : f32
      %491 = vector.broadcast %cst_208 : f32 to vector<8x128xf32>
      %492 = arith.mulf %485, %491 : vector<8x128xf32>
      %cst_209 = arith.constant 0.707106769 : f32
      %493 = vector.broadcast %cst_209 : f32 to vector<8x128xf32>
      %494 = arith.mulf %488, %493 : vector<8x128xf32>
      %c62 = arith.constant 62 : index
      %495 = arith.index_cast %arg3 : i32 to index
      %c0_210 = arith.constant 0 : index
      %c0_211 = arith.constant 0 : index
      %496 = vector.load %arg1[%c62, %495, %c0_210, %c0_211] : memref<82x2x8x128xf32, #tpu.memory_space<vmem>>, vector<1x1x8x128xf32>
      %497 = vector.shape_cast %496 : vector<1x1x8x128xf32> to vector<8x128xf32>
      %498 = arith.mulf %490, %497 : vector<8x128xf32>
      %499 = arith.mulf %492, %497 : vector<8x128xf32>
      %500 = arith.mulf %494, %497 : vector<8x128xf32>
      %c63 = arith.constant 63 : index
      %501 = arith.index_cast %arg3 : i32 to index
      %c0_212 = arith.constant 0 : index
      %c0_213 = arith.constant 0 : index
      %502 = vector.load %arg1[%c63, %501, %c0_212, %c0_213] : memref<82x2x8x128xf32, #tpu.memory_space<vmem>>, vector<1x1x8x128xf32>
      %503 = vector.shape_cast %502 : vector<1x1x8x128xf32> to vector<8x128xf32>
      %504 = arith.mulf %490, %503 : vector<8x128xf32>
      %505 = arith.mulf %492, %503 : vector<8x128xf32>
      %506 = arith.mulf %494, %503 : vector<8x128xf32>
      %c7_214 = arith.constant 7 : index
      %507 = arith.index_cast %arg3 : i32 to index
      %c0_215 = arith.constant 0 : index
      %c0_216 = arith.constant 0 : index
      %508 = vector.load %arg1[%c7_214, %507, %c0_215, %c0_216] : memref<82x2x8x128xf32, #tpu.memory_space<vmem>>, vector<1x1x8x128xf32>
      %509 = vector.shape_cast %508 : vector<1x1x8x128xf32> to vector<8x128xf32>
      %c8_217 = arith.constant 8 : index
      %510 = arith.index_cast %arg3 : i32 to index
      %c0_218 = arith.constant 0 : index
      %c0_219 = arith.constant 0 : index
      %511 = vector.load %arg1[%c8_217, %510, %c0_218, %c0_219] : memref<82x2x8x128xf32, #tpu.memory_space<vmem>>, vector<1x1x8x128xf32>
      %512 = vector.shape_cast %511 : vector<1x1x8x128xf32> to vector<8x128xf32>
      %c9_220 = arith.constant 9 : index
      %513 = arith.index_cast %arg3 : i32 to index
      %c0_221 = arith.constant 0 : index
      %c0_222 = arith.constant 0 : index
      %514 = vector.load %arg1[%c9_220, %513, %c0_221, %c0_222] : memref<82x2x8x128xf32, #tpu.memory_space<vmem>>, vector<1x1x8x128xf32>
      %515 = vector.shape_cast %514 : vector<1x1x8x128xf32> to vector<8x128xf32>
      %516 = arith.mulf %512, %12 : vector<8x128xf32>
      %517 = arith.mulf %515, %9 : vector<8x128xf32>
      %518 = arith.subf %516, %517 : vector<8x128xf32>
      %519 = arith.mulf %515, %6 : vector<8x128xf32>
      %520 = arith.mulf %509, %12 : vector<8x128xf32>
      %521 = arith.subf %519, %520 : vector<8x128xf32>
      %522 = arith.mulf %509, %9 : vector<8x128xf32>
      %523 = arith.mulf %512, %6 : vector<8x128xf32>
      %524 = arith.subf %522, %523 : vector<8x128xf32>
      %cst_223 = arith.constant 0.707106769 : f32
      %525 = vector.broadcast %cst_223 : f32 to vector<8x128xf32>
      %526 = arith.mulf %518, %525 : vector<8x128xf32>
      %cst_224 = arith.constant 0.707106769 : f32
      %527 = vector.broadcast %cst_224 : f32 to vector<8x128xf32>
      %528 = arith.mulf %521, %527 : vector<8x128xf32>
      %cst_225 = arith.constant 0.707106769 : f32
      %529 = vector.broadcast %cst_225 : f32 to vector<8x128xf32>
      %530 = arith.mulf %524, %529 : vector<8x128xf32>
      %c64 = arith.constant 64 : index
      %531 = arith.index_cast %arg3 : i32 to index
      %c0_226 = arith.constant 0 : index
      %c0_227 = arith.constant 0 : index
      %532 = vector.load %arg1[%c64, %531, %c0_226, %c0_227] : memref<82x2x8x128xf32, #tpu.memory_space<vmem>>, vector<1x1x8x128xf32>
      %533 = vector.shape_cast %532 : vector<1x1x8x128xf32> to vector<8x128xf32>
      %534 = arith.mulf %526, %533 : vector<8x128xf32>
      %535 = arith.addf %498, %534 : vector<8x128xf32>
      %536 = arith.mulf %528, %533 : vector<8x128xf32>
      %537 = arith.addf %499, %536 : vector<8x128xf32>
      %538 = arith.mulf %530, %533 : vector<8x128xf32>
      %539 = arith.addf %500, %538 : vector<8x128xf32>
      %c65 = arith.constant 65 : index
      %540 = arith.index_cast %arg3 : i32 to index
      %c0_228 = arith.constant 0 : index
      %c0_229 = arith.constant 0 : index
      %541 = vector.load %arg1[%c65, %540, %c0_228, %c0_229] : memref<82x2x8x128xf32, #tpu.memory_space<vmem>>, vector<1x1x8x128xf32>
      %542 = vector.shape_cast %541 : vector<1x1x8x128xf32> to vector<8x128xf32>
      %543 = arith.mulf %526, %542 : vector<8x128xf32>
      %544 = arith.addf %504, %543 : vector<8x128xf32>
      %545 = arith.mulf %528, %542 : vector<8x128xf32>
      %546 = arith.addf %505, %545 : vector<8x128xf32>
      %547 = arith.mulf %530, %542 : vector<8x128xf32>
      %548 = arith.addf %506, %547 : vector<8x128xf32>
      %c10_230 = arith.constant 10 : index
      %549 = arith.index_cast %arg3 : i32 to index
      %c0_231 = arith.constant 0 : index
      %c0_232 = arith.constant 0 : index
      %550 = vector.load %arg1[%c10_230, %549, %c0_231, %c0_232] : memref<82x2x8x128xf32, #tpu.memory_space<vmem>>, vector<1x1x8x128xf32>
      %551 = vector.shape_cast %550 : vector<1x1x8x128xf32> to vector<8x128xf32>
      %552 = arith.mulf %551, %3 : vector<8x128xf32>
      %c11_233 = arith.constant 11 : index
      %553 = arith.index_cast %arg3 : i32 to index
      %c0_234 = arith.constant 0 : index
      %c0_235 = arith.constant 0 : index
      %554 = vector.load %arg1[%c11_233, %553, %c0_234, %c0_235] : memref<82x2x8x128xf32, #tpu.memory_space<vmem>>, vector<1x1x8x128xf32>
      %555 = vector.shape_cast %554 : vector<1x1x8x128xf32> to vector<8x128xf32>
      %556 = arith.mulf %555, %3 : vector<8x128xf32>
      %c12_236 = arith.constant 12 : index
      %557 = arith.index_cast %arg3 : i32 to index
      %c0_237 = arith.constant 0 : index
      %c0_238 = arith.constant 0 : index
      %558 = vector.load %arg1[%c12_236, %557, %c0_237, %c0_238] : memref<82x2x8x128xf32, #tpu.memory_space<vmem>>, vector<1x1x8x128xf32>
      %559 = vector.shape_cast %558 : vector<1x1x8x128xf32> to vector<8x128xf32>
      %560 = arith.mulf %559, %3 : vector<8x128xf32>
      %c66 = arith.constant 66 : index
      %561 = arith.index_cast %arg3 : i32 to index
      %c0_239 = arith.constant 0 : index
      %c0_240 = arith.constant 0 : index
      %562 = vector.load %arg1[%c66, %561, %c0_239, %c0_240] : memref<82x2x8x128xf32, #tpu.memory_space<vmem>>, vector<1x1x8x128xf32>
      %563 = vector.shape_cast %562 : vector<1x1x8x128xf32> to vector<8x128xf32>
      %564 = arith.mulf %552, %563 : vector<8x128xf32>
      %565 = arith.addf %535, %564 : vector<8x128xf32>
      %566 = arith.mulf %556, %563 : vector<8x128xf32>
      %567 = arith.addf %537, %566 : vector<8x128xf32>
      %568 = arith.mulf %560, %563 : vector<8x128xf32>
      %569 = arith.addf %539, %568 : vector<8x128xf32>
      %c67 = arith.constant 67 : index
      %570 = arith.index_cast %arg3 : i32 to index
      %c0_241 = arith.constant 0 : index
      %c0_242 = arith.constant 0 : index
      %571 = vector.load %arg1[%c67, %570, %c0_241, %c0_242] : memref<82x2x8x128xf32, #tpu.memory_space<vmem>>, vector<1x1x8x128xf32>
      %572 = vector.shape_cast %571 : vector<1x1x8x128xf32> to vector<8x128xf32>
      %573 = arith.mulf %552, %572 : vector<8x128xf32>
      %574 = arith.addf %544, %573 : vector<8x128xf32>
      %575 = arith.mulf %556, %572 : vector<8x128xf32>
      %576 = arith.addf %546, %575 : vector<8x128xf32>
      %577 = arith.mulf %560, %572 : vector<8x128xf32>
      %578 = arith.addf %548, %577 : vector<8x128xf32>
      %c13_243 = arith.constant 13 : index
      %579 = arith.index_cast %arg3 : i32 to index
      %c0_244 = arith.constant 0 : index
      %c0_245 = arith.constant 0 : index
      %580 = vector.load %arg1[%c13_243, %579, %c0_244, %c0_245] : memref<82x2x8x128xf32, #tpu.memory_space<vmem>>, vector<1x1x8x128xf32>
      %581 = vector.shape_cast %580 : vector<1x1x8x128xf32> to vector<8x128xf32>
      %582 = arith.mulf %581, %3 : vector<8x128xf32>
      %c14_246 = arith.constant 14 : index
      %583 = arith.index_cast %arg3 : i32 to index
      %c0_247 = arith.constant 0 : index
      %c0_248 = arith.constant 0 : index
      %584 = vector.load %arg1[%c14_246, %583, %c0_247, %c0_248] : memref<82x2x8x128xf32, #tpu.memory_space<vmem>>, vector<1x1x8x128xf32>
      %585 = vector.shape_cast %584 : vector<1x1x8x128xf32> to vector<8x128xf32>
      %586 = arith.mulf %585, %3 : vector<8x128xf32>
      %c15_249 = arith.constant 15 : index
      %587 = arith.index_cast %arg3 : i32 to index
      %c0_250 = arith.constant 0 : index
      %c0_251 = arith.constant 0 : index
      %588 = vector.load %arg1[%c15_249, %587, %c0_250, %c0_251] : memref<82x2x8x128xf32, #tpu.memory_space<vmem>>, vector<1x1x8x128xf32>
      %589 = vector.shape_cast %588 : vector<1x1x8x128xf32> to vector<8x128xf32>
      %590 = arith.mulf %589, %3 : vector<8x128xf32>
      %c68 = arith.constant 68 : index
      %591 = arith.index_cast %arg3 : i32 to index
      %c0_252 = arith.constant 0 : index
      %c0_253 = arith.constant 0 : index
      %592 = vector.load %arg1[%c68, %591, %c0_252, %c0_253] : memref<82x2x8x128xf32, #tpu.memory_space<vmem>>, vector<1x1x8x128xf32>
      %593 = vector.shape_cast %592 : vector<1x1x8x128xf32> to vector<8x128xf32>
      %594 = arith.mulf %582, %593 : vector<8x128xf32>
      %595 = arith.addf %565, %594 : vector<8x128xf32>
      %596 = arith.mulf %586, %593 : vector<8x128xf32>
      %597 = arith.addf %567, %596 : vector<8x128xf32>
      %598 = arith.mulf %590, %593 : vector<8x128xf32>
      %599 = arith.addf %569, %598 : vector<8x128xf32>
      %c69 = arith.constant 69 : index
      %600 = arith.index_cast %arg3 : i32 to index
      %c0_254 = arith.constant 0 : index
      %c0_255 = arith.constant 0 : index
      %601 = vector.load %arg1[%c69, %600, %c0_254, %c0_255] : memref<82x2x8x128xf32, #tpu.memory_space<vmem>>, vector<1x1x8x128xf32>
      %602 = vector.shape_cast %601 : vector<1x1x8x128xf32> to vector<8x128xf32>
      %603 = arith.mulf %582, %602 : vector<8x128xf32>
      %604 = arith.addf %574, %603 : vector<8x128xf32>
      %605 = arith.mulf %586, %602 : vector<8x128xf32>
      %606 = arith.addf %576, %605 : vector<8x128xf32>
      %607 = arith.mulf %590, %602 : vector<8x128xf32>
      %608 = arith.addf %578, %607 : vector<8x128xf32>
      %c16 = arith.constant 16 : index
      %609 = arith.index_cast %arg3 : i32 to index
      %c0_256 = arith.constant 0 : index
      %c0_257 = arith.constant 0 : index
      %610 = vector.load %arg1[%c16, %609, %c0_256, %c0_257] : memref<82x2x8x128xf32, #tpu.memory_space<vmem>>, vector<1x1x8x128xf32>
      %611 = vector.shape_cast %610 : vector<1x1x8x128xf32> to vector<8x128xf32>
      %612 = arith.mulf %611, %6 : vector<8x128xf32>
      %613 = arith.mulf %611, %9 : vector<8x128xf32>
      %614 = arith.mulf %611, %12 : vector<8x128xf32>
      %c70 = arith.constant 70 : index
      %615 = arith.index_cast %arg3 : i32 to index
      %c0_258 = arith.constant 0 : index
      %c0_259 = arith.constant 0 : index
      %616 = vector.load %arg1[%c70, %615, %c0_258, %c0_259] : memref<82x2x8x128xf32, #tpu.memory_space<vmem>>, vector<1x1x8x128xf32>
      %617 = vector.shape_cast %616 : vector<1x1x8x128xf32> to vector<8x128xf32>
      %618 = arith.mulf %612, %617 : vector<8x128xf32>
      %619 = arith.addf %595, %618 : vector<8x128xf32>
      %620 = arith.mulf %613, %617 : vector<8x128xf32>
      %621 = arith.addf %597, %620 : vector<8x128xf32>
      %622 = arith.mulf %614, %617 : vector<8x128xf32>
      %623 = arith.addf %599, %622 : vector<8x128xf32>
      %c71 = arith.constant 71 : index
      %624 = arith.index_cast %arg3 : i32 to index
      %c0_260 = arith.constant 0 : index
      %c0_261 = arith.constant 0 : index
      %625 = vector.load %arg1[%c71, %624, %c0_260, %c0_261] : memref<82x2x8x128xf32, #tpu.memory_space<vmem>>, vector<1x1x8x128xf32>
      %626 = vector.shape_cast %625 : vector<1x1x8x128xf32> to vector<8x128xf32>
      %627 = arith.mulf %612, %626 : vector<8x128xf32>
      %628 = arith.addf %604, %627 : vector<8x128xf32>
      %629 = arith.mulf %613, %626 : vector<8x128xf32>
      %630 = arith.addf %606, %629 : vector<8x128xf32>
      %631 = arith.mulf %614, %626 : vector<8x128xf32>
      %632 = arith.addf %608, %631 : vector<8x128xf32>
      %c17 = arith.constant 17 : index
      %633 = arith.index_cast %arg3 : i32 to index
      %c0_262 = arith.constant 0 : index
      %c0_263 = arith.constant 0 : index
      %634 = vector.load %arg1[%c17, %633, %c0_262, %c0_263] : memref<82x2x8x128xf32, #tpu.memory_space<vmem>>, vector<1x1x8x128xf32>
      %635 = vector.shape_cast %634 : vector<1x1x8x128xf32> to vector<8x128xf32>
      %636 = arith.mulf %635, %6 : vector<8x128xf32>
      %637 = arith.mulf %635, %9 : vector<8x128xf32>
      %638 = arith.mulf %635, %12 : vector<8x128xf32>
      %c72 = arith.constant 72 : index
      %639 = arith.index_cast %arg3 : i32 to index
      %c0_264 = arith.constant 0 : index
      %c0_265 = arith.constant 0 : index
      %640 = vector.load %arg1[%c72, %639, %c0_264, %c0_265] : memref<82x2x8x128xf32, #tpu.memory_space<vmem>>, vector<1x1x8x128xf32>
      %641 = vector.shape_cast %640 : vector<1x1x8x128xf32> to vector<8x128xf32>
      %642 = arith.mulf %636, %641 : vector<8x128xf32>
      %643 = arith.addf %619, %642 : vector<8x128xf32>
      %644 = arith.mulf %637, %641 : vector<8x128xf32>
      %645 = arith.addf %621, %644 : vector<8x128xf32>
      %646 = arith.mulf %638, %641 : vector<8x128xf32>
      %647 = arith.addf %623, %646 : vector<8x128xf32>
      %c73 = arith.constant 73 : index
      %648 = arith.index_cast %arg3 : i32 to index
      %c0_266 = arith.constant 0 : index
      %c0_267 = arith.constant 0 : index
      %649 = vector.load %arg1[%c73, %648, %c0_266, %c0_267] : memref<82x2x8x128xf32, #tpu.memory_space<vmem>>, vector<1x1x8x128xf32>
      %650 = vector.shape_cast %649 : vector<1x1x8x128xf32> to vector<8x128xf32>
      %651 = arith.mulf %636, %650 : vector<8x128xf32>
      %652 = arith.addf %628, %651 : vector<8x128xf32>
      %653 = arith.mulf %637, %650 : vector<8x128xf32>
      %654 = arith.addf %630, %653 : vector<8x128xf32>
      %655 = arith.mulf %638, %650 : vector<8x128xf32>
      %656 = arith.addf %632, %655 : vector<8x128xf32>
      %cst_268 = arith.constant 0.408248305 : f32
      %657 = vector.broadcast %cst_268 : f32 to vector<8x128xf32>
      %658 = arith.mulf %643, %657 : vector<8x128xf32>
      %c10_269 = arith.constant 10 : index
      %659 = arith.index_cast %arg3 : i32 to index
      %c0_270 = arith.constant 0 : index
      %c0_271 = arith.constant 0 : index
      %660 = vector.load %arg2[%c10_269, %659, %c0_270, %c0_271] : memref<18x2x8x128xf32, #tpu.memory_space<vmem>>, vector<1x1x8x128xf32>
      %661 = vector.shape_cast %660 : vector<1x1x8x128xf32> to vector<8x128xf32>
      %662 = vector.shape_cast %658 : vector<8x128xf32> to vector<1x1x8x128xf32>
      tpu.vector_store %arg2[%c10_269, %659, %c0_270, %c0_271], %662 {strides = array<i32>} : memref<18x2x8x128xf32, #tpu.memory_space<vmem>>, vector<1x1x8x128xf32>,
      %cst_272 = arith.constant 0.408248305 : f32
      %663 = vector.broadcast %cst_272 : f32 to vector<8x128xf32>
      %664 = arith.mulf %645, %663 : vector<8x128xf32>
      %c11_273 = arith.constant 11 : index
      %665 = arith.index_cast %arg3 : i32 to index
      %c0_274 = arith.constant 0 : index
      %c0_275 = arith.constant 0 : index
      %666 = vector.load %arg2[%c11_273, %665, %c0_274, %c0_275] : memref<18x2x8x128xf32, #tpu.memory_space<vmem>>, vector<1x1x8x128xf32>
      %667 = vector.shape_cast %666 : vector<1x1x8x128xf32> to vector<8x128xf32>
      %668 = vector.shape_cast %664 : vector<8x128xf32> to vector<1x1x8x128xf32>
      tpu.vector_store %arg2[%c11_273, %665, %c0_274, %c0_275], %668 {strides = array<i32>} : memref<18x2x8x128xf32, #tpu.memory_space<vmem>>, vector<1x1x8x128xf32>,
      %cst_276 = arith.constant 0.408248305 : f32
      %669 = vector.broadcast %cst_276 : f32 to vector<8x128xf32>
      %670 = arith.mulf %647, %669 : vector<8x128xf32>
      %c12_277 = arith.constant 12 : index
      %671 = arith.index_cast %arg3 : i32 to index
      %c0_278 = arith.constant 0 : index
      %c0_279 = arith.constant 0 : index
      %672 = vector.load %arg2[%c12_277, %671, %c0_278, %c0_279] : memref<18x2x8x128xf32, #tpu.memory_space<vmem>>, vector<1x1x8x128xf32>
      %673 = vector.shape_cast %672 : vector<1x1x8x128xf32> to vector<8x128xf32>
      %674 = vector.shape_cast %670 : vector<8x128xf32> to vector<1x1x8x128xf32>
      tpu.vector_store %arg2[%c12_277, %671, %c0_278, %c0_279], %674 {strides = array<i32>} : memref<18x2x8x128xf32, #tpu.memory_space<vmem>>, vector<1x1x8x128xf32>,
      %cst_280 = arith.constant 0.408248305 : f32
      %675 = vector.broadcast %cst_280 : f32 to vector<8x128xf32>
      %676 = arith.mulf %652, %675 : vector<8x128xf32>
      %c13_281 = arith.constant 13 : index
      %677 = arith.index_cast %arg3 : i32 to index
      %c0_282 = arith.constant 0 : index
      %c0_283 = arith.constant 0 : index
      %678 = vector.load %arg2[%c13_281, %677, %c0_282, %c0_283] : memref<18x2x8x128xf32, #tpu.memory_space<vmem>>, vector<1x1x8x128xf32>
      %679 = vector.shape_cast %678 : vector<1x1x8x128xf32> to vector<8x128xf32>
      %680 = vector.shape_cast %676 : vector<8x128xf32> to vector<1x1x8x128xf32>
      tpu.vector_store %arg2[%c13_281, %677, %c0_282, %c0_283], %680 {strides = array<i32>} : memref<18x2x8x128xf32, #tpu.memory_space<vmem>>, vector<1x1x8x128xf32>,
      %cst_284 = arith.constant 0.408248305 : f32
      %681 = vector.broadcast %cst_284 : f32 to vector<8x128xf32>
      %682 = arith.mulf %654, %681 : vector<8x128xf32>
      %c14_285 = arith.constant 14 : index
      %683 = arith.index_cast %arg3 : i32 to index
      %c0_286 = arith.constant 0 : index
      %c0_287 = arith.constant 0 : index
      %684 = vector.load %arg2[%c14_285, %683, %c0_286, %c0_287] : memref<18x2x8x128xf32, #tpu.memory_space<vmem>>, vector<1x1x8x128xf32>
      %685 = vector.shape_cast %684 : vector<1x1x8x128xf32> to vector<8x128xf32>
      %686 = vector.shape_cast %682 : vector<8x128xf32> to vector<1x1x8x128xf32>
      tpu.vector_store %arg2[%c14_285, %683, %c0_286, %c0_287], %686 {strides = array<i32>} : memref<18x2x8x128xf32, #tpu.memory_space<vmem>>, vector<1x1x8x128xf32>,
      %cst_288 = arith.constant 0.408248305 : f32
      %687 = vector.broadcast %cst_288 : f32 to vector<8x128xf32>
      %688 = arith.mulf %656, %687 : vector<8x128xf32>
      %c15_289 = arith.constant 15 : index
      %689 = arith.index_cast %arg3 : i32 to index
      %c0_290 = arith.constant 0 : index
      %c0_291 = arith.constant 0 : index
      %690 = vector.load %arg2[%c15_289, %689, %c0_290, %c0_291] : memref<18x2x8x128xf32, #tpu.memory_space<vmem>>, vector<1x1x8x128xf32>
      %691 = vector.shape_cast %690 : vector<1x1x8x128xf32> to vector<8x128xf32>
      %692 = vector.shape_cast %688 : vector<8x128xf32> to vector<1x1x8x128xf32>
      tpu.vector_store %arg2[%c15_289, %689, %c0_290, %c0_291], %692 {strides = array<i32>} : memref<18x2x8x128xf32, #tpu.memory_space<vmem>>, vector<1x1x8x128xf32>,
      %c10_292 = arith.constant 10 : index
      %693 = arith.index_cast %arg3 : i32 to index
      %c0_293 = arith.constant 0 : index
      %c0_294 = arith.constant 0 : index
      %694 = vector.load %arg1[%c10_292, %693, %c0_293, %c0_294] : memref<82x2x8x128xf32, #tpu.memory_space<vmem>>, vector<1x1x8x128xf32>
      %695 = vector.shape_cast %694 : vector<1x1x8x128xf32> to vector<8x128xf32>
      %696 = arith.mulf %695, %6 : vector<8x128xf32>
      %c11_295 = arith.constant 11 : index
      %697 = arith.index_cast %arg3 : i32 to index
      %c0_296 = arith.constant 0 : index
      %c0_297 = arith.constant 0 : index
      %698 = vector.load %arg1[%c11_295, %697, %c0_296, %c0_297] : memref<82x2x8x128xf32, #tpu.memory_space<vmem>>, vector<1x1x8x128xf32>
      %699 = vector.shape_cast %698 : vector<1x1x8x128xf32> to vector<8x128xf32>
      %700 = arith.mulf %699, %9 : vector<8x128xf32>
      %701 = arith.addf %696, %700 : vector<8x128xf32>
      %c12_298 = arith.constant 12 : index
      %702 = arith.index_cast %arg3 : i32 to index
      %c0_299 = arith.constant 0 : index
      %c0_300 = arith.constant 0 : index
      %703 = vector.load %arg1[%c12_298, %702, %c0_299, %c0_300] : memref<82x2x8x128xf32, #tpu.memory_space<vmem>>, vector<1x1x8x128xf32>
      %704 = vector.shape_cast %703 : vector<1x1x8x128xf32> to vector<8x128xf32>
      %705 = arith.mulf %704, %12 : vector<8x128xf32>
      %706 = arith.addf %701, %705 : vector<8x128xf32>
      %cst_301 = arith.constant 0.577350259 : f32
      %707 = vector.broadcast %cst_301 : f32 to vector<8x128xf32>
      %708 = arith.mulf %706, %707 : vector<8x128xf32>
      %c74 = arith.constant 74 : index
      %709 = arith.index_cast %arg3 : i32 to index
      %c0_302 = arith.constant 0 : index
      %c0_303 = arith.constant 0 : index
      %710 = vector.load %arg1[%c74, %709, %c0_302, %c0_303] : memref<82x2x8x128xf32, #tpu.memory_space<vmem>>, vector<1x1x8x128xf32>
      %711 = vector.shape_cast %710 : vector<1x1x8x128xf32> to vector<8x128xf32>
      %712 = arith.mulf %708, %711 : vector<8x128xf32>
      %c75 = arith.constant 75 : index
      %713 = arith.index_cast %arg3 : i32 to index
      %c0_304 = arith.constant 0 : index
      %c0_305 = arith.constant 0 : index
      %714 = vector.load %arg1[%c75, %713, %c0_304, %c0_305] : memref<82x2x8x128xf32, #tpu.memory_space<vmem>>, vector<1x1x8x128xf32>
      %715 = vector.shape_cast %714 : vector<1x1x8x128xf32> to vector<8x128xf32>
      %716 = arith.mulf %708, %715 : vector<8x128xf32>
      %c13_306 = arith.constant 13 : index
      %717 = arith.index_cast %arg3 : i32 to index
      %c0_307 = arith.constant 0 : index
      %c0_308 = arith.constant 0 : index
      %718 = vector.load %arg1[%c13_306, %717, %c0_307, %c0_308] : memref<82x2x8x128xf32, #tpu.memory_space<vmem>>, vector<1x1x8x128xf32>
      %719 = vector.shape_cast %718 : vector<1x1x8x128xf32> to vector<8x128xf32>
      %720 = arith.mulf %719, %6 : vector<8x128xf32>
      %c14_309 = arith.constant 14 : index
      %721 = arith.index_cast %arg3 : i32 to index
      %c0_310 = arith.constant 0 : index
      %c0_311 = arith.constant 0 : index
      %722 = vector.load %arg1[%c14_309, %721, %c0_310, %c0_311] : memref<82x2x8x128xf32, #tpu.memory_space<vmem>>, vector<1x1x8x128xf32>
      %723 = vector.shape_cast %722 : vector<1x1x8x128xf32> to vector<8x128xf32>
      %724 = arith.mulf %723, %9 : vector<8x128xf32>
      %725 = arith.addf %720, %724 : vector<8x128xf32>
      %c15_312 = arith.constant 15 : index
      %726 = arith.index_cast %arg3 : i32 to index
      %c0_313 = arith.constant 0 : index
      %c0_314 = arith.constant 0 : index
      %727 = vector.load %arg1[%c15_312, %726, %c0_313, %c0_314] : memref<82x2x8x128xf32, #tpu.memory_space<vmem>>, vector<1x1x8x128xf32>
      %728 = vector.shape_cast %727 : vector<1x1x8x128xf32> to vector<8x128xf32>
      %729 = arith.mulf %728, %12 : vector<8x128xf32>
      %730 = arith.addf %725, %729 : vector<8x128xf32>
      %cst_315 = arith.constant 0.577350259 : f32
      %731 = vector.broadcast %cst_315 : f32 to vector<8x128xf32>
      %732 = arith.mulf %730, %731 : vector<8x128xf32>
      %c76 = arith.constant 76 : index
      %733 = arith.index_cast %arg3 : i32 to index
      %c0_316 = arith.constant 0 : index
      %c0_317 = arith.constant 0 : index
      %734 = vector.load %arg1[%c76, %733, %c0_316, %c0_317] : memref<82x2x8x128xf32, #tpu.memory_space<vmem>>, vector<1x1x8x128xf32>
      %735 = vector.shape_cast %734 : vector<1x1x8x128xf32> to vector<8x128xf32>
      %736 = arith.mulf %732, %735 : vector<8x128xf32>
      %737 = arith.addf %712, %736 : vector<8x128xf32>
      %c77 = arith.constant 77 : index
      %738 = arith.index_cast %arg3 : i32 to index
      %c0_318 = arith.constant 0 : index
      %c0_319 = arith.constant 0 : index
      %739 = vector.load %arg1[%c77, %738, %c0_318, %c0_319] : memref<82x2x8x128xf32, #tpu.memory_space<vmem>>, vector<1x1x8x128xf32>
      %740 = vector.shape_cast %739 : vector<1x1x8x128xf32> to vector<8x128xf32>
      %741 = arith.mulf %732, %740 : vector<8x128xf32>
      %742 = arith.addf %716, %741 : vector<8x128xf32>
      %c16_320 = arith.constant 16 : index
      %743 = arith.index_cast %arg3 : i32 to index
      %c0_321 = arith.constant 0 : index
      %c0_322 = arith.constant 0 : index
      %744 = vector.load %arg1[%c16_320, %743, %c0_321, %c0_322] : memref<82x2x8x128xf32, #tpu.memory_space<vmem>>, vector<1x1x8x128xf32>
      %745 = vector.shape_cast %744 : vector<1x1x8x128xf32> to vector<8x128xf32>
      %746 = arith.mulf %745, %3 : vector<8x128xf32>
      %c78 = arith.constant 78 : index
      %747 = arith.index_cast %arg3 : i32 to index
      %c0_323 = arith.constant 0 : index
      %c0_324 = arith.constant 0 : index
      %748 = vector.load %arg1[%c78, %747, %c0_323, %c0_324] : memref<82x2x8x128xf32, #tpu.memory_space<vmem>>, vector<1x1x8x128xf32>
      %749 = vector.shape_cast %748 : vector<1x1x8x128xf32> to vector<8x128xf32>
      %750 = arith.mulf %746, %749 : vector<8x128xf32>
      %751 = arith.addf %737, %750 : vector<8x128xf32>
      %c79 = arith.constant 79 : index
      %752 = arith.index_cast %arg3 : i32 to index
      %c0_325 = arith.constant 0 : index
      %c0_326 = arith.constant 0 : index
      %753 = vector.load %arg1[%c79, %752, %c0_325, %c0_326] : memref<82x2x8x128xf32, #tpu.memory_space<vmem>>, vector<1x1x8x128xf32>
      %754 = vector.shape_cast %753 : vector<1x1x8x128xf32> to vector<8x128xf32>
      %755 = arith.mulf %746, %754 : vector<8x128xf32>
      %756 = arith.addf %742, %755 : vector<8x128xf32>
      %c17_327 = arith.constant 17 : index
      %757 = arith.index_cast %arg3 : i32 to index
      %c0_328 = arith.constant 0 : index
      %c0_329 = arith.constant 0 : index
      %758 = vector.load %arg1[%c17_327, %757, %c0_328, %c0_329] : memref<82x2x8x128xf32, #tpu.memory_space<vmem>>, vector<1x1x8x128xf32>
      %759 = vector.shape_cast %758 : vector<1x1x8x128xf32> to vector<8x128xf32>
      %760 = arith.mulf %759, %3 : vector<8x128xf32>
      %c80 = arith.constant 80 : index
      %761 = arith.index_cast %arg3 : i32 to index
      %c0_330 = arith.constant 0 : index
      %c0_331 = arith.constant 0 : index
      %762 = vector.load %arg1[%c80, %761, %c0_330, %c0_331] : memref<82x2x8x128xf32, #tpu.memory_space<vmem>>, vector<1x1x8x128xf32>
      %763 = vector.shape_cast %762 : vector<1x1x8x128xf32> to vector<8x128xf32>
      %764 = arith.mulf %760, %763 : vector<8x128xf32>
      %765 = arith.addf %751, %764 : vector<8x128xf32>
      %c81 = arith.constant 81 : index
      %766 = arith.index_cast %arg3 : i32 to index
      %c0_332 = arith.constant 0 : index
      %c0_333 = arith.constant 0 : index
      %767 = vector.load %arg1[%c81, %766, %c0_332, %c0_333] : memref<82x2x8x128xf32, #tpu.memory_space<vmem>>, vector<1x1x8x128xf32>
      %768 = vector.shape_cast %767 : vector<1x1x8x128xf32> to vector<8x128xf32>
      %769 = arith.mulf %760, %768 : vector<8x128xf32>
      %770 = arith.addf %756, %769 : vector<8x128xf32>
      %cst_334 = arith.constant 5.000000e-01 : f32
      %771 = vector.broadcast %cst_334 : f32 to vector<8x128xf32>
      %772 = arith.mulf %765, %771 : vector<8x128xf32>
      %c16_335 = arith.constant 16 : index
      %773 = arith.index_cast %arg3 : i32 to index
      %c0_336 = arith.constant 0 : index
      %c0_337 = arith.constant 0 : index
      %774 = vector.load %arg2[%c16_335, %773, %c0_336, %c0_337] : memref<18x2x8x128xf32, #tpu.memory_space<vmem>>, vector<1x1x8x128xf32>
      %775 = vector.shape_cast %774 : vector<1x1x8x128xf32> to vector<8x128xf32>
      %776 = vector.shape_cast %772 : vector<8x128xf32> to vector<1x1x8x128xf32>
      tpu.vector_store %arg2[%c16_335, %773, %c0_336, %c0_337], %776 {strides = array<i32>} : memref<18x2x8x128xf32, #tpu.memory_space<vmem>>, vector<1x1x8x128xf32>,
      %cst_338 = arith.constant 5.000000e-01 : f32
      %777 = vector.broadcast %cst_338 : f32 to vector<8x128xf32>
      %778 = arith.mulf %770, %777 : vector<8x128xf32>
      %c17_339 = arith.constant 17 : index
      %779 = arith.index_cast %arg3 : i32 to index
      %c0_340 = arith.constant 0 : index
      %c0_341 = arith.constant 0 : index
      %780 = vector.load %arg2[%c17_339, %779, %c0_340, %c0_341] : memref<18x2x8x128xf32, #tpu.memory_space<vmem>>, vector<1x1x8x128xf32>
      %781 = vector.shape_cast %780 : vector<1x1x8x128xf32> to vector<8x128xf32>
      %782 = vector.shape_cast %778 : vector<8x128xf32> to vector<1x1x8x128xf32>
      tpu.vector_store %arg2[%c17_339, %779, %c0_340, %c0_341], %782 {strides = array<i32>} : memref<18x2x8x128xf32, #tpu.memory_space<vmem>>, vector<1x1x8x128xf32>,
    }
    %c2_i32_0 = arith.constant 2 : i32
    return
  }
  func.func @transform_0(%arg0: i32) -> (i32, i32, i32, i32) {
    %c0_i32 = arith.constant 0 : i32
    %c0_i32_0 = arith.constant 0 : i32
    %c0_i32_1 = arith.constant 0 : i32
    %c0_i32_2 = arith.constant 0 : i32
    return %c0_i32, %arg0, %c0_i32_0, %c0_i32_1 : i32, i32, i32, i32
  }
  func.func @transform_1(%arg0: i32) -> (i32, i32, i32, i32) {
    %c0_i32 = arith.constant 0 : i32
    %c0_i32_0 = arith.constant 0 : i32
    %c0_i32_1 = arith.constant 0 : i32
    %c0_i32_2 = arith.constant 0 : i32
    return %c0_i32, %arg0, %c0_i32_0, %c0_i32_1 : i32, i32, i32, i32
  }
}

</mosaic_0001>

<llo_original>
// kernel: tpu_custom_call.1
$region0: #{tpu_custom_call.1}
  #allocation0 [shape = 'u32[]', space=smem, size = 0x4, offset = 0x4, fixed_abs, tag = 'smem constant byte address 0x4 - core index']
  #allocation1 [shape = 'u32[72,128]{1,0:T(1,128)}', space=vmem, size = 0x9000, scoped, tag = 'internal scratch']
  #allocation6 [shape = 's32[]', space=sflag, size = 0x4, offset = 0, fixed_abs, tag = 'sflag constant byte address 0x0 - dummy sync flag']
  #allocation8 [shape = 's32[]', space=sflag, size = 0x4, offset = 0, fixed_abs, tag = 'sflag constant byte address 0x0 - dummy sync flag']
  %s0 = inlined_call_operand.hbm [shape: f32[82,4,8,128], index: 0, kind: input, shape index: {}]
  %s1 = inlined_call_operand.hbm [shape: f32[18,4,8,128], index: 1, kind: output, shape index: {}]
  %s2 = sld [smem:[#allocation0]]
  $region48: #{tpu_custom_call.1} parent=0
    _
  %s4 = ssub.s32 1, %s2
  %s5 = scalar_select 0, %s4, %s2
  $region1: #{tpu_custom_call.1} parent=0
    #allocation2 [shape = 'u8[1343488]{0}', space=vmem, size = 0x148000, scoped, tag = 'input window, operand 0']
    #allocation3 [shape = 's32[2]{0}', space=sflag, size = 0x8, scoped, tag = 'scoped memory for tpu_custom_call.1']
    #allocation4 [shape = 's32[2]{0}', space=sflag, size = 0x8, scoped, tag = 'scoped memory for tpu_custom_call.1']
    #allocation5 [shape = 'u8[294912]{0}', space=vmem, size = 0x48000, scoped, tag = 'output window, operand 0']
    %6 = vsyncpa [#allocation3], 0
    %s7 = scalar_lea.sflag [#allocation3], 1
    %8 = vsyncpa %s7, 0
    %9 = vsyncpa [#allocation4], 0
    %s10 = scalar_lea.sflag [#allocation4], 1
    %11 = vsyncpa %s10, 0
    loop: start=0, step=1, limit=4
    $region2: #{tpu_custom_call.1} parent=1 // loop_pre_header
      _
    $region3: #{tpu_custom_call.1} parent=1 // loop_header
      %s13 = sphi 0, %s17
      %p14 = scmp.ge.s32.totalorder %s13, 4
      %s23 = sphi 0, %s25
      %s26 = sphi 0, %s23
      %s27 = sphi 0, %s26
      %s43 = sphi 0, %s27
      %s49 = sphi 0, %s51
      %s52 = sphi 0, %s49
      %s53 = sphi 0, %s52
      %s69 = sphi 0, %s53
    $region4: #{tpu_custom_call.1} parent=1 // loop_header_branch
      %16 = sbr.rel (%p14) target = $region8
    $region5: #{tpu_custom_call.1} parent=1 // loop_body
      %s18 = ssub.s32 %s13, 1
      %s19 = ssub.s32 %s13, 2
      %s20 = sadd.s32 %s13, 1
      %s21 = ssub.s32 %s13, %s20
      %p22 = scmp.eq.s32.totalorder %s21, 0
      %s24 = sadd.s32 %s23, 1
      %s25 = scalar_select %p22, %s23, %s24
      %p28 = pneg %p22
      %p29 = scmp.eq.s32.totalorder %s13, 1
      %p30 = por %p28, %p29
      %p31 = scmp.ne.s32.totalorder %s23, %s26
      %p32 = scmp.eq.s32.totalorder %s13, 0
      %p33 = por %p31, %p32
      %p34 = scmp.ne.s32.totalorder %s23, %s26
      %p35 = scmp.eq.s32.totalorder %s18, 1
      %p36 = por %p34, %p35
      %p37 = scmp.ne.s32.totalorder %s26, %s27
      %p38 = scmp.eq.s32.totalorder %s18, 0
      %p39 = por %p37, %p38
      %p40 = scmp.ne.s32.totalorder %s26, %s27
      %p41 = scmp.eq.s32.totalorder %s19, 1
      %p42 = por %p40, %p41
      %p44 = scmp.ne.s32.totalorder %s27, %s43
      %p45 = scmp.eq.s32.totalorder %s19, 0
      %p46 = por %p44, %p45
      %s47 = ssub.s32 %s13, %s20
      %p48 = scmp.eq.s32.totalorder %s47, 0
      %s50 = sadd.s32 %s49, 1
      %s51 = scalar_select %p48, %s49, %s50
      %p54 = pneg %p48
      %p55 = scmp.eq.s32.totalorder %s13, 1
      %p56 = por %p54, %p55
      %p57 = scmp.ne.s32.totalorder %s49, %s52
      %p58 = scmp.eq.s32.totalorder %s13, 0
      %p59 = por %p57, %p58
      %p60 = scmp.ne.s32.totalorder %s49, %s52
      %p61 = scmp.eq.s32.totalorder %s18, 1
      %p62 = por %p60, %p61
      %p63 = scmp.ne.s32.totalorder %s52, %s53
      %p64 = scmp.eq.s32.totalorder %s18, 0
      %p65 = por %p63, %p64
      %p66 = scmp.ne.s32.totalorder %s52, %s53
      %p67 = scmp.eq.s32.totalorder %s19, 1
      %p68 = por %p66, %p67
      %p70 = scmp.ne.s32.totalorder %s53, %s69
      %p71 = scmp.eq.s32.totalorder %s19, 0
      %p72 = por %p70, %p71
      %p73 = scmp.le.s32.totalorder 1, %s13
      %p74 = scmp.lt.s32.totalorder %s13, 3
      %p75 = pnand %p73, %p74
      %p76 = pneg %p75
      // Predicated region
      $region9: #{tpu_custom_call.1} parent=5 // pred_check
        _
      $region10: #{tpu_custom_call.1} parent=5 // pred_check_branch
        %78 = sbr.rel (%p75) target = $region12
      $region11: #{tpu_custom_call.1} parent=5 // pred_region
        %s79 = ssub.s32 %s13, 1
      $region12: #{tpu_custom_call.1} parent=5 // pred_fallthru
        _
      %p80 = scmp.lt.s32.totalorder %s13, 2
      // Predicated region
      $region13: #{tpu_custom_call.1} parent=5 // pred_check
        %p81 = pneg %p80
      $region14: #{tpu_custom_call.1} parent=5 // pred_check_branch
        %83 = sbr.rel (%p81) target = $region16
      $region15: #{tpu_custom_call.1} parent=5 // pred_region
        // Predicated region
        $region17: #{tpu_custom_call.1} parent=15 // pred_check
          %p84 = pneg %p33
        $region18: #{tpu_custom_call.1} parent=15 // pred_check_branch
          %86 = sbr.rel (%p84) target = $region20
        $region19: #{tpu_custom_call.1} parent=15 // pred_region
          #allocation7 [shape = 'u32[6]{0}', space=smem, size = 0x18, scoped, tag = 'DMA stride descriptor']
          %s87 = sand.u32 %s23, 1
          %s88 = scalar_lea.sflag [#allocation3], %s87
          %s89 = sand.u32 %s23, 1
          %s90 = smul.addr %s89, 1312
          %s91 = scalar_lea.vmem [#allocation2], %s90
          %s92 = smul.u32 2, %s13
          %94 = vsyncadd %s88, 0
          %s95 = smul.addr %s92, 8
          %s96 = scalar_lea.hbm %s0, %s95
          %s98 = sshll.u32 1, 14
          %s99 = sxor.u32 4294967295, %s98
          %s101 = sld [smem:[#allocation0]]
          %s102 = sadd.s32 2, %s101
          %s104 = sshll.u32 7, 26
          %s105 = sxor.u32 4294967295, %s104
          %s106 = sand.u32 0, %s105
          %s107 = sshll.u32 %s102, 26
          %s108 = sor.u32 %s106, %s107
          %s109 = sshll.u32 %s96, 4
          %s110 = int_to_ptr.hbm [resolvable:$true] %s109
          %s111 = sshll.u32 %s91, 4
          %s112 = int_to_ptr.vmem [resolvable:$true] %s111
          %118 = sst [smem:[#allocation7]] 512
          %s119 = scalar_lea.smem [#allocation7], 1
          %120 = sst [smem:[%s119]] 256
          %s121 = scalar_lea.smem [#allocation7], 2
          %122 = sst [smem:[%s121]] 2
          %s123 = scalar_lea.smem [#allocation7], 3
          %124 = sst [smem:[%s123]] 128
          %s125 = scalar_lea.smem [#allocation7], 4
          %126 = sst [smem:[%s125]] 128
          %s127 = scalar_lea.smem [#allocation7], 5
          %128 = sst [smem:[%s127]] 8
          %130 = dma.general %s110, 20992, %s112, %s88, [#allocation6], [#allocation7], %s108, 0
        $region20: #{tpu_custom_call.1} parent=15 // pred_fallthru
          _
      $region16: #{tpu_custom_call.1} parent=5 // pred_fallthru
        _
      %p131 = scmp.le.s32.totalorder 1, %s13
      %p132 = scmp.lt.s32.totalorder %s13, 3
      %p133 = pnand %p131, %p132
      %p134 = pneg %p133
      // Predicated region
      $region21: #{tpu_custom_call.1} parent=5 // pred_check
        _
      $region22: #{tpu_custom_call.1} parent=5 // pred_check_branch
        %136 = sbr.rel (%p133) target = $region24
      $region23: #{tpu_custom_call.1} parent=5 // pred_region
        %s137 = ssub.s32 %s13, 1
        %s138 = sand.u32 %s26, 1
        %s139 = scalar_lea.sflag [#allocation3], %s138
        %s140 = sand.u32 %s26, 1
        %s141 = smul.addr %s140, 1312
        %s142 = scalar_lea.vmem [#allocation2], %s141
        // Predicated region
        $region25: #{tpu_custom_call.1} parent=23 // pred_check
          %p143 = pneg %p39
        $region26: #{tpu_custom_call.1} parent=23 // pred_check_branch
          %145 = sbr.rel (%p143) target = $region28
        $region27: #{tpu_custom_call.1} parent=23 // pred_region
          %147 = dma.done %s139, 20992
        $region28: #{tpu_custom_call.1} parent=23 // pred_fallthru
          _
        %s148 = sand.u32 %s26, 1
        %s149 = scalar_lea.sflag [#allocation3], %s148
        %s150 = sand.u32 %s26, 1
        %s151 = smul.addr %s150, 1312
        %s152 = scalar_lea.vmem [#allocation2], %s151
        %p153 = pneg %p39
        %p154 = pneg %p36
        %p155 = pneg %p65
        %p156 = pneg %p62
        %s157 = sand.u32 %s52, 1
        %s158 = scalar_lea.sflag [#allocation4], %s157
        %s159 = sand.u32 %s52, 1
        %s160 = smul.addr %s159, 288
        %s161 = scalar_lea.vmem [#allocation5], %s160
        %s162 = smul.u32 2, %s18
        %s163 = smul.u32 2, %s18
        loop: start=0, step=1, limit=2
        $region29: #{tpu_custom_call.1} parent=23 // loop_pre_header
          _
        $region30: #{tpu_custom_call.1} parent=23 // loop_header
          %s165 = sphi 0, %s169
          %p166 = scmp.ge.s32.totalorder %s165, 2
        $region31: #{tpu_custom_call.1} parent=23 // loop_header_branch
          %168 = sbr.rel (%p166) target = $region35
        $region32: #{tpu_custom_call.1} parent=23 // loop_body
          %s170 = smul.u32 %s165, 8
          %s171 = sadd.s32 %s170, 288
          %s172 = scalar_lea.vmem %s142, %s171 [#allocation2]
          %v173 = vld [vmem:[%s172] sm:$0xff]
          %s174 = sadd.s32 %s170, 304
          %s175 = scalar_lea.vmem %s142, %s174 [#allocation2]
          %v176 = vld [vmem:[%s175] sm:$0xff]
          %s177 = sadd.s32 %s170, 320
          %s178 = scalar_lea.vmem %s142, %s177 [#allocation2]
          %v179 = vld [vmem:[%s178] sm:$0xff]
          %s180 = sadd.s32 %s170, 336
          %s181 = scalar_lea.vmem %s142, %s180 [#allocation2]
          %v182 = vld [vmem:[%s181] sm:$0xff]
          %s183 = scalar_lea.vmem %s142, %s170 [#allocation2]
          %v184 = vld [vmem:[%s183] sm:$0xff]
          %v185 = vmul.f32 %v184, %v173
          %s186 = sadd.s32 %s170, 352
          %s187 = scalar_lea.vmem %s142, %s186 [#allocation2]
          %v188 = vld [vmem:[%s187] sm:$0xff]
          %v189 = vmul.f32 %v185, %v188
          %s190 = sadd.s32 %s170, 368
          %s191 = scalar_lea.vmem %s142, %s190 [#allocation2]
          %v192 = vld [vmem:[%s191] sm:$0xff]
          %v193 = vmul.f32 %v185, %v192
          %s194 = sadd.s32 %s170, 384
          %s195 = scalar_lea.vmem %s142, %s194 [#allocation2]
          %v196 = vld [vmem:[%s195] sm:$0xff]
          %v197 = vmul.f32 %v185, %v196
          %s198 = sadd.s32 %s170, 400
          %s199 = scalar_lea.vmem %s142, %s198 [#allocation2]
          %v200 = vld [vmem:[%s199] sm:$0xff]
          %v201 = vmul.f32 %v185, %v200
          %s202 = sadd.s32 %s170, 16
          %s203 = scalar_lea.vmem %s142, %s202 [#allocation2]
          %v204 = vld [vmem:[%s203] sm:$0xff]
          %v205 = vmul.f32 %v204, %v173
          %s206 = sadd.s32 %s170, 416
          %s207 = scalar_lea.vmem %s142, %s206 [#allocation2]
          %v208 = vld [vmem:[%s207] sm:$0xff]
          %v209 = vmul.f32 %v205, %v208
          %v210 = vadd.f32 %v189, %v209
          %s211 = sadd.s32 %s170, 432
          %s212 = scalar_lea.vmem %s142, %s211 [#allocation2]
          %v213 = vld [vmem:[%s212] sm:$0xff]
          %v214 = vmul.f32 %v205, %v213
          %v215 = vadd.f32 %v193, %v214
          %s216 = sadd.s32 %s170, 448
          %s217 = scalar_lea.vmem %s142, %s216 [#allocation2]
          %v218 = vld [vmem:[%s217] sm:$0xff]
          %v219 = vmul.f32 %v205, %v218
          %v220 = vadd.f32 %v197, %v219
          %s221 = sadd.s32 %s170, 464
          %s222 = scalar_lea.vmem %s142, %s221 [#allocation2]
          %v223 = vld [vmem:[%s222] sm:$0xff]
          %v224 = vmul.f32 %v205, %v223
          %v225 = vadd.f32 %v201, %v224
          %s226 = sadd.s32 %s170, 32
          %s227 = scalar_lea.vmem %s142, %s226 [#allocation2]
          %v228 = vld [vmem:[%s227] sm:$0xff]
          %v229 = vmul.f32 %v228, %v173
          %s230 = sadd.s32 %s170, 480
          %s231 = scalar_lea.vmem %s142, %s230 [#allocation2]
          %v232 = vld [vmem:[%s231] sm:$0xff]
          %v233 = vmul.f32 %v229, %v232
          %v234 = vadd.f32 %v210, %v233
          %s235 = sadd.s32 %s170, 496
          %s236 = scalar_lea.vmem %s142, %s235 [#allocation2]
          %v237 = vld [vmem:[%s236] sm:$0xff]
          %v238 = vmul.f32 %v229, %v237
          %v239 = vadd.f32 %v215, %v238
          %s240 = sadd.s32 %s170, 512
          %s241 = scalar_lea.vmem %s142, %s240 [#allocation2]
          %v242 = vld [vmem:[%s241] sm:$0xff]
          %v243 = vmul.f32 %v229, %v242
          %v244 = vadd.f32 %v220, %v243
          %s245 = sadd.s32 %s170, 528
          %s246 = scalar_lea.vmem %s142, %s245 [#allocation2]
          %v247 = vld [vmem:[%s246] sm:$0xff]
          %v248 = vmul.f32 %v229, %v247
          %v249 = vadd.f32 %v225, %v248
          %s250 = sadd.s32 %s170, 48
          %s251 = scalar_lea.vmem %s142, %s250 [#allocation2]
          %v252 = vld [vmem:[%s251] sm:$0xff]
          %v253 = vmul.f32 %v252, %v173
          %s254 = sadd.s32 %s170, 544
          %s255 = scalar_lea.vmem %s142, %s254 [#allocation2]
          %v256 = vld [vmem:[%s255] sm:$0xff]
          %v257 = vmul.f32 %v253, %v256
          %v258 = vadd.f32 %v234, %v257
          %s259 = sadd.s32 %s170, 560
          %s260 = scalar_lea.vmem %s142, %s259 [#allocation2]
          %v261 = vld [vmem:[%s260] sm:$0xff]
          %v262 = vmul.f32 %v253, %v261
          %v263 = vadd.f32 %v239, %v262
          %s264 = sadd.s32 %s170, 576
          %s265 = scalar_lea.vmem %s142, %s264 [#allocation2]
          %v266 = vld [vmem:[%s265] sm:$0xff]
          %v267 = vmul.f32 %v253, %v266
          %v268 = vadd.f32 %v244, %v267
          %s269 = sadd.s32 %s170, 592
          %s270 = scalar_lea.vmem %s142, %s269 [#allocation2]
          %v271 = vld [vmem:[%s270] sm:$0xff]
          %v272 = vmul.f32 %v253, %v271
          %v273 = vadd.f32 %v249, %v272
          %s274 = sadd.s32 %s170, 64
          %s275 = scalar_lea.vmem %s142, %s274 [#allocation2]
          %v276 = vld [vmem:[%s275] sm:$0xff]
          %v277 = vmul.f32 %v276, %v176
          %s278 = sadd.s32 %s170, 80
          %s279 = scalar_lea.vmem %s142, %s278 [#allocation2]
          %v280 = vld [vmem:[%s279] sm:$0xff]
          %v281 = vmul.f32 %v280, %v179
          %v282 = vadd.f32 %v277, %v281
          %s283 = sadd.s32 %s170, 96
          %s284 = scalar_lea.vmem %s142, %s283 [#allocation2]
          %v285 = vld [vmem:[%s284] sm:$0xff]
          %v286 = vmul.f32 %v285, %v182
          %v287 = vadd.f32 %v282, %v286
          %v288 = vmul.f32 %v287, 0.57735026
          %s289 = sadd.s32 %s170, 608
          %s290 = scalar_lea.vmem %s142, %s289 [#allocation2]
          %v291 = vld [vmem:[%s290] sm:$0xff]
          %v292 = vmul.f32 %v288, %v291
          %v293 = vadd.f32 %v258, %v292
          %s294 = sadd.s32 %s170, 624
          %s295 = scalar_lea.vmem %s142, %s294 [#allocation2]
          %v296 = vld [vmem:[%s295] sm:$0xff]
          %v297 = vmul.f32 %v288, %v296
          %v298 = vadd.f32 %v263, %v297
          %s299 = sadd.s32 %s170, 640
          %s300 = scalar_lea.vmem %s142, %s299 [#allocation2]
          %v301 = vld [vmem:[%s300] sm:$0xff]
          %v302 = vmul.f32 %v288, %v301
          %v303 = vadd.f32 %v268, %v302
          %s304 = sadd.s32 %s170, 656
          %s305 = scalar_lea.vmem %s142, %s304 [#allocation2]
          %v306 = vld [vmem:[%s305] sm:$0xff]
          %v307 = vmul.f32 %v288, %v306
          %v308 = vadd.f32 %v273, %v307
          %s309 = sadd.s32 %s170, 112
          %s310 = scalar_lea.vmem %s142, %s309 [#allocation2]
          %v311 = vld [vmem:[%s310] sm:$0xff]
          %v312 = vmul.f32 %v311, %v176
          %s313 = sadd.s32 %s170, 128
          %s314 = scalar_lea.vmem %s142, %s313 [#allocation2]
          %v315 = vld [vmem:[%s314] sm:$0xff]
          %v316 = vmul.f32 %v315, %v179
          %v317 = vadd.f32 %v312, %v316
          %s318 = sadd.s32 %s170, 144
          %s319 = scalar_lea.vmem %s142, %s318 [#allocation2]
          %v320 = vld [vmem:[%s319] sm:$0xff]
          %v321 = vmul.f32 %v320, %v182
          %v322 = vadd.f32 %v317, %v321
          %v323 = vmul.f32 %v322, 0.57735026
          %s324 = sadd.s32 %s170, 672
          %s325 = scalar_lea.vmem %s142, %s324 [#allocation2]
          %v326 = vld [vmem:[%s325] sm:$0xff]
          %v327 = vmul.f32 %v323, %v326
          %v328 = vadd.f32 %v293, %v327
          %s329 = sadd.s32 %s170, 688
          %s330 = scalar_lea.vmem %s142, %s329 [#allocation2]
          %v331 = vld [vmem:[%s330] sm:$0xff]
          %v332 = vmul.f32 %v323, %v331
          %v333 = vadd.f32 %v298, %v332
          %s334 = sadd.s32 %s170, 704
          %s335 = scalar_lea.vmem %s142, %s334 [#allocation2]
          %v336 = vld [vmem:[%s335] sm:$0xff]
          %v337 = vmul.f32 %v323, %v336
          %v338 = vadd.f32 %v303, %v337
          %s339 = sadd.s32 %s170, 720
          %s340 = scalar_lea.vmem %s142, %s339 [#allocation2]
          %v341 = vld [vmem:[%s340] sm:$0xff]
          %v342 = vmul.f32 %v323, %v341
          %v343 = vadd.f32 %v308, %v342
          %v344 = vmul.f32 %v328, 0.4082483
          %s345 = scalar_lea.vmem %s161, %s170 [#allocation5]
          %346 = vst [vmem:[%s345] sm:$0xff] %v344
          %v347 = vmul.f32 %v333, 0.4082483
          %s348 = scalar_lea.vmem %s161, %s202 [#allocation5]
          %349 = vst [vmem:[%s348] sm:$0xff] %v347
          %v350 = vmul.f32 %v338, 0.4082483
          %s351 = scalar_lea.vmem %s161, %s226 [#allocation5]
          %352 = vst [vmem:[%s351] sm:$0xff] %v350
          %v353 = vmul.f32 %v343, 0.4082483
          %s354 = scalar_lea.vmem %s161, %s250 [#allocation5]
          %355 = vst [vmem:[%s354] sm:$0xff] %v353
          %v356 = vld [vmem:[%s183] sm:$0xff]
          %v357 = vmul.f32 %v356, %v176
          %v358 = vmul.f32 %v356, %v179
          %v359 = vmul.f32 %v356, %v182
          %s360 = sadd.s32 %s170, 736
          %s361 = scalar_lea.vmem %s142, %s360 [#allocation2]
          %v362 = vld [vmem:[%s361] sm:$0xff]
          %v363 = vmul.f32 %v357, %v362
          %v364 = vmul.f32 %v358, %v362
          %v365 = vmul.f32 %v359, %v362
          %s366 = sadd.s32 %s170, 752
          %s367 = scalar_lea.vmem %s142, %s366 [#allocation2]
          %v368 = vld [vmem:[%s367] sm:$0xff]
          %v369 = vmul.f32 %v357, %v368
          %v370 = vmul.f32 %v358, %v368
          %v371 = vmul.f32 %v359, %v368
          %v372 = vld [vmem:[%s203] sm:$0xff]
          %v373 = vmul.f32 %v372, %v176
          %v374 = vmul.f32 %v372, %v179
          %v375 = vmul.f32 %v372, %v182
          %s376 = sadd.s32 %s170, 768
          %s377 = scalar_lea.vmem %s142, %s376 [#allocation2]
          %v378 = vld [vmem:[%s377] sm:$0xff]
          %v379 = vmul.f32 %v373, %v378
          %v380 = vadd.f32 %v363, %v379
          %v381 = vmul.f32 %v374, %v378
          %v382 = vadd.f32 %v364, %v381
          %v383 = vmul.f32 %v375, %v378
          %v384 = vadd.f32 %v365, %v383
          %s385 = sadd.s32 %s170, 784
          %s386 = scalar_lea.vmem %s142, %s385 [#allocation2]
          %v387 = vld [vmem:[%s386] sm:$0xff]
          %v388 = vmul.f32 %v373, %v387
          %v389 = vadd.f32 %v369, %v388
          %v390 = vmul.f32 %v374, %v387
          %v391 = vadd.f32 %v370, %v390
          %v392 = vmul.f32 %v375, %v387
          %v393 = vadd.f32 %v371, %v392
          %v394 = vld [vmem:[%s227] sm:$0xff]
          %v395 = vmul.f32 %v394, %v176
          %v396 = vmul.f32 %v394, %v179
          %v397 = vmul.f32 %v394, %v182
          %s398 = sadd.s32 %s170, 800
          %s399 = scalar_lea.vmem %s142, %s398 [#allocation2]
          %v400 = vld [vmem:[%s399] sm:$0xff]
          %v401 = vmul.f32 %v395, %v400
          %v402 = vadd.f32 %v380, %v401
          %v403 = vmul.f32 %v396, %v400
          %v404 = vadd.f32 %v382, %v403
          %v405 = vmul.f32 %v397, %v400
          %v406 = vadd.f32 %v384, %v405
          %s407 = sadd.s32 %s170, 816
          %s408 = scalar_lea.vmem %s142, %s407 [#allocation2]
          %v409 = vld [vmem:[%s408] sm:$0xff]
          %v410 = vmul.f32 %v395, %v409
          %v411 = vadd.f32 %v389, %v410
          %v412 = vmul.f32 %v396, %v409
          %v413 = vadd.f32 %v391, %v412
          %v414 = vmul.f32 %v397, %v409
          %v415 = vadd.f32 %v393, %v414
          %v416 = vld [vmem:[%s251] sm:$0xff]
          %v417 = vmul.f32 %v416, %v176
          %v418 = vmul.f32 %v416, %v179
          %v419 = vmul.f32 %v416, %v182
          %s420 = sadd.s32 %s170, 832
          %s421 = scalar_lea.vmem %s142, %s420 [#allocation2]
          %v422 = vld [vmem:[%s421] sm:$0xff]
          %v423 = vmul.f32 %v417, %v422
          %v424 = vadd.f32 %v402, %v423
          %v425 = vmul.f32 %v418, %v422
          %v426 = vadd.f32 %v404, %v425
          %v427 = vmul.f32 %v419, %v422
          %v428 = vadd.f32 %v406, %v427
          %s429 = sadd.s32 %s170, 848
          %s430 = scalar_lea.vmem %s142, %s429 [#allocation2]
          %v431 = vld [vmem:[%s430] sm:$0xff]
          %v432 = vmul.f32 %v417, %v431
          %v433 = vadd.f32 %v411, %v432
          %v434 = vmul.f32 %v418, %v431
          %v435 = vadd.f32 %v413, %v434
          %v436 = vmul.f32 %v419, %v431
          %v437 = vadd.f32 %v415, %v436
          %v438 = vld [vmem:[%s275] sm:$0xff]
          %v439 = vmul.f32 %v438, %v173
          %v440 = vld [vmem:[%s279] sm:$0xff]
          %v441 = vmul.f32 %v440, %v173
          %v442 = vld [vmem:[%s284] sm:$0xff]
          %v443 = vmul.f32 %v442, %v173
          %s444 = sadd.s32 %s170, 864
          %s445 = scalar_lea.vmem %s142, %s444 [#allocation2]
          %v446 = vld [vmem:[%s445] sm:$0xff]
          %v447 = vmul.f32 %v439, %v446
          %v448 = vadd.f32 %v424, %v447
          %v449 = vmul.f32 %v441, %v446
          %v450 = vadd.f32 %v426, %v449
          %v451 = vmul.f32 %v443, %v446
          %v452 = vadd.f32 %v428, %v451
          %s453 = sadd.s32 %s170, 880
          %s454 = scalar_lea.vmem %s142, %s453 [#allocation2]
          %v455 = vld [vmem:[%s454] sm:$0xff]
          %v456 = vmul.f32 %v439, %v455
          %v457 = vadd.f32 %v433, %v456
          %v458 = vmul.f32 %v441, %v455
          %v459 = vadd.f32 %v435, %v458
          %v460 = vmul.f32 %v443, %v455
          %v461 = vadd.f32 %v437, %v460
          %v462 = vld [vmem:[%s310] sm:$0xff]
          %v463 = vmul.f32 %v462, %v173
          %v464 = vld [vmem:[%s314] sm:$0xff]
          %v465 = vmul.f32 %v464, %v173
          %v466 = vld [vmem:[%s319] sm:$0xff]
          %v467 = vmul.f32 %v466, %v173
          %s468 = sadd.s32 %s170, 896
          %s469 = scalar_lea.vmem %s142, %s468 [#allocation2]
          %v470 = vld [vmem:[%s469] sm:$0xff]
          %v471 = vmul.f32 %v463, %v470
          %v472 = vadd.f32 %v448, %v471
          %v473 = vmul.f32 %v465, %v470
          %v474 = vadd.f32 %v450, %v473
          %v475 = vmul.f32 %v467, %v470
          %v476 = vadd.f32 %v452, %v475
          %s477 = sadd.s32 %s170, 912
          %s478 = scalar_lea.vmem %s142, %s477 [#allocation2]
          %v479 = vld [vmem:[%s478] sm:$0xff]
          %v480 = vmul.f32 %v463, %v479
          %v481 = vadd.f32 %v457, %v480
          %v482 = vmul.f32 %v465, %v479
          %v483 = vadd.f32 %v459, %v482
          %v484 = vmul.f32 %v467, %v479
          %v485 = vadd.f32 %v461, %v484
          %s486 = sadd.s32 %s170, 160
          %s487 = scalar_lea.vmem %s142, %s486 [#allocation2]
          %v488 = vld [vmem:[%s487] sm:$0xff]
          %s489 = sadd.s32 %s170, 176
          %s490 = scalar_lea.vmem %s142, %s489 [#allocation2]
          %v491 = vld [vmem:[%s490] sm:$0xff]
          %s492 = sadd.s32 %s170, 192
          %s493 = scalar_lea.vmem %s142, %s492 [#allocation2]
          %v494 = vld [vmem:[%s493] sm:$0xff]
          %v495 = vmul.f32 %v491, %v182
          %v496 = vmul.f32 %v494, %v179
          %v497 = vsub.f32 %v495, %v496
          %v498 = vmul.f32 %v494, %v176
          %v499 = vmul.f32 %v488, %v182
          %v500 = vsub.f32 %v498, %v499
          %v501 = vmul.f32 %v488, %v179
          %v502 = vmul.f32 %v491, %v176
          %v503 = vsub.f32 %v501, %v502
          %v504 = vmul.f32 %v497, 0.70710677
          %v505 = vmul.f32 %v500, 0.70710677
          %v506 = vmul.f32 %v503, 0.70710677
          %s507 = sadd.s32 %s170, 928
          %s508 = scalar_lea.vmem %s142, %s507 [#allocation2]
          %v509 = vld [vmem:[%s508] sm:$0xff]
          %v510 = vmul.f32 %v504, %v509
          %v511 = vadd.f32 %v472, %v510
          %v512 = vmul.f32 %v505, %v509
          %v513 = vadd.f32 %v474, %v512
          %v514 = vmul.f32 %v506, %v509
          %v515 = vadd.f32 %v476, %v514
          %s516 = sadd.s32 %s170, 944
          %s517 = scalar_lea.vmem %s142, %s516 [#allocation2]
          %v518 = vld [vmem:[%s517] sm:$0xff]
          %v519 = vmul.f32 %v504, %v518
          %v520 = vadd.f32 %v481, %v519
          %v521 = vmul.f32 %v505, %v518
          %v522 = vadd.f32 %v483, %v521
          %v523 = vmul.f32 %v506, %v518
          %v524 = vadd.f32 %v485, %v523
          %s525 = sadd.s32 %s170, 208
          %s526 = scalar_lea.vmem %s142, %s525 [#allocation2]
          %v527 = vld [vmem:[%s526] sm:$0xff]
          %s528 = sadd.s32 %s170, 224
          %s529 = scalar_lea.vmem %s142, %s528 [#allocation2]
          %v530 = vld [vmem:[%s529] sm:$0xff]
          %s531 = sadd.s32 %s170, 240
          %s532 = scalar_lea.vmem %s142, %s531 [#allocation2]
          %v533 = vld [vmem:[%s532] sm:$0xff]
          %v534 = vmul.f32 %v530, %v182
          %v535 = vmul.f32 %v533, %v179
          %v536 = vsub.f32 %v534, %v535
          %v537 = vmul.f32 %v533, %v176
          %v538 = vmul.f32 %v527, %v182
          %v539 = vsub.f32 %v537, %v538
          %v540 = vmul.f32 %v527, %v179
          %v541 = vmul.f32 %v530, %v176
          %v542 = vsub.f32 %v540, %v541
          %v543 = vmul.f32 %v536, 0.70710677
          %v544 = vmul.f32 %v539, 0.70710677
          %v545 = vmul.f32 %v542, 0.70710677
          %s546 = sadd.s32 %s170, 960
          %s547 = scalar_lea.vmem %s142, %s546 [#allocation2]
          %v548 = vld [vmem:[%s547] sm:$0xff]
          %v549 = vmul.f32 %v543, %v548
          %v550 = vadd.f32 %v511, %v549
          %v551 = vmul.f32 %v544, %v548
          %v552 = vadd.f32 %v513, %v551
          %v553 = vmul.f32 %v545, %v548
          %v554 = vadd.f32 %v515, %v553
          %s555 = sadd.s32 %s170, 976
          %s556 = scalar_lea.vmem %s142, %s555 [#allocation2]
          %v557 = vld [vmem:[%s556] sm:$0xff]
          %v558 = vmul.f32 %v543, %v557
          %v559 = vadd.f32 %v520, %v558
          %v560 = vmul.f32 %v544, %v557
          %v561 = vadd.f32 %v522, %v560
          %v562 = vmul.f32 %v545, %v557
          %v563 = vadd.f32 %v524, %v562
          %v564 = vmul.f32 %v550, 0.35355338
          %s565 = scalar_lea.vmem %s161, %s274 [#allocation5]
          %566 = vst [vmem:[%s565] sm:$0xff] %v564
          %v567 = vmul.f32 %v552, 0.35355338
          %s568 = scalar_lea.vmem %s161, %s278 [#allocation5]
          %569 = vst [vmem:[%s568] sm:$0xff] %v567
          %v570 = vmul.f32 %v554, 0.35355338
          %s571 = scalar_lea.vmem %s161, %s283 [#allocation5]
          %572 = vst [vmem:[%s571] sm:$0xff] %v570
          %v573 = vmul.f32 %v559, 0.35355338
          %s574 = scalar_lea.vmem %s161, %s309 [#allocation5]
          %575 = vst [vmem:[%s574] sm:$0xff] %v573
          %v576 = vmul.f32 %v561, 0.35355338
          %s577 = scalar_lea.vmem %s161, %s313 [#allocation5]
          %578 = vst [vmem:[%s577] sm:$0xff] %v576
          %v579 = vmul.f32 %v563, 0.35355338
          %s580 = scalar_lea.vmem %s161, %s318 [#allocation5]
          %581 = vst [vmem:[%s580] sm:$0xff] %v579
          %v582 = vld [vmem:[%s275] sm:$0xff]
          %v583 = vld [vmem:[%s279] sm:$0xff]
          %v584 = vld [vmem:[%s284] sm:$0xff]
          %v585 = vmul.f32 %v583, %v182
          %v586 = vmul.f32 %v584, %v179
          %v587 = vsub.f32 %v585, %v586
          %v588 = vmul.f32 %v584, %v176
          %v589 = vmul.f32 %v582, %v182
          %v590 = vsub.f32 %v588, %v589
          %v591 = vmul.f32 %v582, %v179
          %v592 = vmul.f32 %v583, %v176
          %v593 = vsub.f32 %v591, %v592
          %v594 = vmul.f32 %v587, 0.70710677
          %v595 = vmul.f32 %v590, 0.70710677
          %v596 = vmul.f32 %v593, 0.70710677
          %s597 = sadd.s32 %s170, 992
          %s598 = scalar_lea.vmem %s142, %s597 [#allocation2]
          %v599 = vld [vmem:[%s598] sm:$0xff]
          %v600 = vmul.f32 %v594, %v599
          %v601 = vmul.f32 %v595, %v599
          %v602 = vmul.f32 %v596, %v599
          %s603 = sadd.s32 %s170, 1008
          %s604 = scalar_lea.vmem %s142, %s603 [#allocation2]
          %v605 = vld [vmem:[%s604] sm:$0xff]
          %v606 = vmul.f32 %v594, %v605
          %v607 = vmul.f32 %v595, %v605
          %v608 = vmul.f32 %v596, %v605
          %v609 = vld [vmem:[%s310] sm:$0xff]
          %v610 = vld [vmem:[%s314] sm:$0xff]
          %v611 = vld [vmem:[%s319] sm:$0xff]
          %v612 = vmul.f32 %v610, %v182
          %v613 = vmul.f32 %v611, %v179
          %v614 = vsub.f32 %v612, %v613
          %v615 = vmul.f32 %v611, %v176
          %v616 = vmul.f32 %v609, %v182
          %v617 = vsub.f32 %v615, %v616
          %v618 = vmul.f32 %v609, %v179
          %v619 = vmul.f32 %v610, %v176
          %v620 = vsub.f32 %v618, %v619
          %v621 = vmul.f32 %v614, 0.70710677
          %v622 = vmul.f32 %v617, 0.70710677
          %v623 = vmul.f32 %v620, 0.70710677
          %s624 = sadd.s32 %s170, 1024
          %s625 = scalar_lea.vmem %s142, %s624 [#allocation2]
          %v626 = vld [vmem:[%s625] sm:$0xff]
          %v627 = vmul.f32 %v621, %v626
          %v628 = vadd.f32 %v600, %v627
          %v629 = vmul.f32 %v622, %v626
          %v630 = vadd.f32 %v601, %v629
          %v631 = vmul.f32 %v623, %v626
          %v632 = vadd.f32 %v602, %v631
          %s633 = sadd.s32 %s170, 1040
          %s634 = scalar_lea.vmem %s142, %s633 [#allocation2]
          %v635 = vld [vmem:[%s634] sm:$0xff]
          %v636 = vmul.f32 %v621, %v635
          %v637 = vadd.f32 %v606, %v636
          %v638 = vmul.f32 %v622, %v635
          %v639 = vadd.f32 %v607, %v638
          %v640 = vmul.f32 %v623, %v635
          %v641 = vadd.f32 %v608, %v640
          %v642 = vld [vmem:[%s487] sm:$0xff]
          %v643 = vmul.f32 %v642, %v173
          %v644 = vld [vmem:[%s490] sm:$0xff]
          %v645 = vmul.f32 %v644, %v173
          %v646 = vld [vmem:[%s493] sm:$0xff]
          %v647 = vmul.f32 %v646, %v173
          %s648 = sadd.s32 %s170, 1056
          %s649 = scalar_lea.vmem %s142, %s648 [#allocation2]
          %v650 = vld [vmem:[%s649] sm:$0xff]
          %v651 = vmul.f32 %v643, %v650
          %v652 = vadd.f32 %v628, %v651
          %v653 = vmul.f32 %v645, %v650
          %v654 = vadd.f32 %v630, %v653
          %v655 = vmul.f32 %v647, %v650
          %v656 = vadd.f32 %v632, %v655
          %s657 = sadd.s32 %s170, 1072
          %s658 = scalar_lea.vmem %s142, %s657 [#allocation2]
          %v659 = vld [vmem:[%s658] sm:$0xff]
          %v660 = vmul.f32 %v643, %v659
          %v661 = vadd.f32 %v637, %v660
          %v662 = vmul.f32 %v645, %v659
          %v663 = vadd.f32 %v639, %v662
          %v664 = vmul.f32 %v647, %v659
          %v665 = vadd.f32 %v641, %v664
          %v666 = vld [vmem:[%s526] sm:$0xff]
          %v667 = vmul.f32 %v666, %v173
          %v668 = vld [vmem:[%s529] sm:$0xff]
          %v669 = vmul.f32 %v668, %v173
          %v670 = vld [vmem:[%s532] sm:$0xff]
          %v671 = vmul.f32 %v670, %v173
          %s672 = sadd.s32 %s170, 1088
          %s673 = scalar_lea.vmem %s142, %s672 [#allocation2]
          %v674 = vld [vmem:[%s673] sm:$0xff]
          %v675 = vmul.f32 %v667, %v674
          %v676 = vadd.f32 %v652, %v675
          %v677 = vmul.f32 %v669, %v674
          %v678 = vadd.f32 %v654, %v677
          %v679 = vmul.f32 %v671, %v674
          %v680 = vadd.f32 %v656, %v679
          %s681 = sadd.s32 %s170, 1104
          %s682 = scalar_lea.vmem %s142, %s681 [#allocation2]
          %v683 = vld [vmem:[%s682] sm:$0xff]
          %v684 = vmul.f32 %v667, %v683
          %v685 = vadd.f32 %v661, %v684
          %v686 = vmul.f32 %v669, %v683
          %v687 = vadd.f32 %v663, %v686
          %v688 = vmul.f32 %v671, %v683
          %v689 = vadd.f32 %v665, %v688
          %s690 = sadd.s32 %s170, 256
          %s691 = scalar_lea.vmem %s142, %s690 [#allocation2]
          %v692 = vld [vmem:[%s691] sm:$0xff]
          %v693 = vmul.f32 %v692, %v176
          %v694 = vmul.f32 %v692, %v179
          %v695 = vmul.f32 %v692, %v182
          %s696 = sadd.s32 %s170, 1120
          %s697 = scalar_lea.vmem %s142, %s696 [#allocation2]
          %v698 = vld [vmem:[%s697] sm:$0xff]
          %v699 = vmul.f32 %v693, %v698
          %v700 = vadd.f32 %v676, %v699
          %v701 = vmul.f32 %v694, %v698
          %v702 = vadd.f32 %v678, %v701
          %v703 = vmul.f32 %v695, %v698
          %v704 = vadd.f32 %v680, %v703
          %s705 = sadd.s32 %s170, 1136
          %s706 = scalar_lea.vmem %s142, %s705 [#allocation2]
          %v707 = vld [vmem:[%s706] sm:$0xff]
          %v708 = vmul.f32 %v693, %v707
          %v709 = vadd.f32 %v685, %v708
          %v710 = vmul.f32 %v694, %v707
          %v711 = vadd.f32 %v687, %v710
          %v712 = vmul.f32 %v695, %v707
          %v713 = vadd.f32 %v689, %v712
          %s714 = sadd.s32 %s170, 272
          %s715 = scalar_lea.vmem %s142, %s714 [#allocation2]
          %v716 = vld [vmem:[%s715] sm:$0xff]
          %v717 = vmul.f32 %v716, %v176
          %v718 = vmul.f32 %v716, %v179
          %v719 = vmul.f32 %v716, %v182
          %s720 = sadd.s32 %s170, 1152
          %s721 = scalar_lea.vmem %s142, %s720 [#allocation2]
          %v722 = vld [vmem:[%s721] sm:$0xff]
          %v723 = vmul.f32 %v717, %v722
          %v724 = vadd.f32 %v700, %v723
          %v725 = vmul.f32 %v718, %v722
          %v726 = vadd.f32 %v702, %v725
          %v727 = vmul.f32 %v719, %v722
          %v728 = vadd.f32 %v704, %v727
          %s729 = sadd.s32 %s170, 1168
          %s730 = scalar_lea.vmem %s142, %s729 [#allocation2]
          %v731 = vld [vmem:[%s730] sm:$0xff]
          %v732 = vmul.f32 %v717, %v731
          %v733 = vadd.f32 %v709, %v732
          %v734 = vmul.f32 %v718, %v731
          %v735 = vadd.f32 %v711, %v734
          %v736 = vmul.f32 %v719, %v731
          %v737 = vadd.f32 %v713, %v736
          %v738 = vmul.f32 %v724, 0.4082483
          %s739 = scalar_lea.vmem %s161, %s486 [#allocation5]
          %740 = vst [vmem:[%s739] sm:$0xff] %v738
          %v741 = vmul.f32 %v726, 0.4082483
          %s742 = scalar_lea.vmem %s161, %s489 [#allocation5]
          %743 = vst [vmem:[%s742] sm:$0xff] %v741
          %v744 = vmul.f32 %v728, 0.4082483
          %s745 = scalar_lea.vmem %s161, %s492 [#allocation5]
          %746 = vst [vmem:[%s745] sm:$0xff] %v744
          %v747 = vmul.f32 %v733, 0.4082483
          %s748 = scalar_lea.vmem %s161, %s525 [#allocation5]
          %749 = vst [vmem:[%s748] sm:$0xff] %v747
          %v750 = vmul.f32 %v735, 0.4082483
          %s751 = scalar_lea.vmem %s161, %s528 [#allocation5]
          %752 = vst [vmem:[%s751] sm:$0xff] %v750
          %v753 = vmul.f32 %v737, 0.4082483
          %s754 = scalar_lea.vmem %s161, %s531 [#allocation5]
          %755 = vst [vmem:[%s754] sm:$0xff] %v753
          %v756 = vld [vmem:[%s487] sm:$0xff]
          %v757 = vmul.f32 %v756, %v176
          %v758 = vld [vmem:[%s490] sm:$0xff]
          %v759 = vmul.f32 %v758, %v179
          %v760 = vadd.f32 %v757, %v759
          %v761 = vld [vmem:[%s493] sm:$0xff]
          %v762 = vmul.f32 %v761, %v182
          %v763 = vadd.f32 %v760, %v762
          %v764 = vmul.f32 %v763, 0.57735026
          %s765 = sadd.s32 %s170, 1184
          %s766 = scalar_lea.vmem %s142, %s765 [#allocation2]
          %v767 = vld [vmem:[%s766] sm:$0xff]
          %v768 = vmul.f32 %v764, %v767
          %s769 = sadd.s32 %s170, 1200
          %s770 = scalar_lea.vmem %s142, %s769 [#allocation2]
          %v771 = vld [vmem:[%s770] sm:$0xff]
          %v772 = vmul.f32 %v764, %v771
          %v773 = vld [vmem:[%s526] sm:$0xff]
          %v774 = vmul.f32 %v773, %v176
          %v775 = vld [vmem:[%s529] sm:$0xff]
          %v776 = vmul.f32 %v775, %v179
          %v777 = vadd.f32 %v774, %v776
          %v778 = vld [vmem:[%s532] sm:$0xff]
          %v779 = vmul.f32 %v778, %v182
          %v780 = vadd.f32 %v777, %v779
          %v781 = vmul.f32 %v780, 0.57735026
          %s782 = sadd.s32 %s170, 1216
          %s783 = scalar_lea.vmem %s142, %s782 [#allocation2]
          %v784 = vld [vmem:[%s783] sm:$0xff]
          %v785 = vmul.f32 %v781, %v784
          %v786 = vadd.f32 %v768, %v785
          %s787 = sadd.s32 %s170, 1232
          %s788 = scalar_lea.vmem %s142, %s787 [#allocation2]
          %v789 = vld [vmem:[%s788] sm:$0xff]
          %v790 = vmul.f32 %v781, %v789
          %v791 = vadd.f32 %v772, %v790
          %v792 = vld [vmem:[%s691] sm:$0xff]
          %v793 = vmul.f32 %v792, %v173
          %s794 = sadd.s32 %s170, 1248
          %s795 = scalar_lea.vmem %s142, %s794 [#allocation2]
          %v796 = vld [vmem:[%s795] sm:$0xff]
          %v797 = vmul.f32 %v793, %v796
          %v798 = vadd.f32 %v786, %v797
          %s799 = sadd.s32 %s170, 1264
          %s800 = scalar_lea.vmem %s142, %s799 [#allocation2]
          %v801 = vld [vmem:[%s800] sm:$0xff]
          %v802 = vmul.f32 %v793, %v801
          %v803 = vadd.f32 %v791, %v802
          %v804 = vld [vmem:[%s715] sm:$0xff]
          %v805 = vmul.f32 %v804, %v173
          %s806 = sadd.s32 %s170, 1280
          %s807 = scalar_lea.vmem %s142, %s806 [#allocation2]
          %v808 = vld [vmem:[%s807] sm:$0xff]
          %v809 = vmul.f32 %v805, %v808
          %v810 = vadd.f32 %v798, %v809
          %s811 = sadd.s32 %s170, 1296
          %s812 = scalar_lea.vmem %s142, %s811 [#allocation2]
          %v813 = vld [vmem:[%s812] sm:$0xff]
          %v814 = vmul.f32 %v805, %v813
          %v815 = vadd.f32 %v803, %v814
          %v816 = vmul.f32 %v810, 0.5
          %s817 = scalar_lea.vmem %s161, %s690 [#allocation5]
          %818 = vst [vmem:[%s817] sm:$0xff] %v816
          %v819 = vmul.f32 %v815, 0.5
          %s820 = scalar_lea.vmem %s161, %s714 [#allocation5]
          %821 = vst [vmem:[%s820] sm:$0xff] %v819
        $region33: #{tpu_custom_call.1} parent=23 // loop_footer
          %s169 = sadd.s32 1, %s165
        $region34: #{tpu_custom_call.1} parent=23 // loop_footer_branch
          %164 = sbr.rel target = $region30
        $region35: #{tpu_custom_call.1} parent=23 // loop_exit
          _
        %s822 = sand.u32 %s52, 1
        %s823 = scalar_lea.sflag [#allocation4], %s822
        %s824 = sand.u32 %s52, 1
        %s825 = smul.addr %s824, 288
        %s826 = scalar_lea.vmem [#allocation5], %s825
        // Predicated region
        $region36: #{tpu_custom_call.1} parent=23 // pred_check
          %p827 = pneg %p62
        $region37: #{tpu_custom_call.1} parent=23 // pred_check_branch
          %829 = sbr.rel (%p827) target = $region39
        $region38: #{tpu_custom_call.1} parent=23 // pred_region
          #allocation9 [shape = 'u32[6]{0}', space=smem, size = 0x18, scoped, tag = 'DMA stride descriptor']
          %s830 = smul.u32 2, %s18
          %832 = vsyncadd %s823, 0
          %s833 = smul.addr %s830, 8
          %s834 = scalar_lea.hbm %s1, %s833
          %s836 = sshll.u32 1, 14
          %s837 = sxor.u32 4294967295, %s836
          %s840 = sshll.u32 7, 18
          %s841 = sxor.u32 4294967295, %s840
          %s842 = sand.u32 0, %s841
          %s844 = sor.u32 %s842, 0
          %s845 = sshll.u32 %s826, 4
          %s846 = int_to_ptr.vmem [resolvable:$true] %s845
          %s847 = sshll.u32 %s834, 4
          %s848 = int_to_ptr.hbm [resolvable:$true] %s847
          %854 = sst [smem:[#allocation9]] 256
          %s855 = scalar_lea.smem [#allocation9], 1
          %856 = sst [smem:[%s855]] 512
          %s857 = scalar_lea.smem [#allocation9], 2
          %858 = sst [smem:[%s857]] 2
          %s859 = scalar_lea.smem [#allocation9], 3
          %860 = sst [smem:[%s859]] 128
          %s861 = scalar_lea.smem [#allocation9], 4
          %862 = sst [smem:[%s861]] 128
          %s863 = scalar_lea.smem [#allocation9], 5
          %864 = sst [smem:[%s863]] 8
          %866 = dma.general %s846, 4608, %s848, %s823, [#allocation8], [#allocation9], %s844, 0
        $region39: #{tpu_custom_call.1} parent=23 // pred_fallthru
          _
      $region24: #{tpu_custom_call.1} parent=5 // pred_fallthru
        _
      %p867 = scmp.le.s32.totalorder 2, %s13
      // Predicated region
      $region40: #{tpu_custom_call.1} parent=5 // pred_check
        %p868 = pneg %p867
      $region41: #{tpu_custom_call.1} parent=5 // pred_check_branch
        %870 = sbr.rel (%p868) target = $region43
      $region42: #{tpu_custom_call.1} parent=5 // pred_region
        %s871 = ssub.s32 %s13, 2
        // Predicated region
        $region44: #{tpu_custom_call.1} parent=42 // pred_check
          %p872 = pneg %p68
        $region45: #{tpu_custom_call.1} parent=42 // pred_check_branch
          %874 = sbr.rel (%p872) target = $region47
        $region46: #{tpu_custom_call.1} parent=42 // pred_region
          %s875 = sand.u32 %s53, 1
          %s876 = scalar_lea.sflag [#allocation4], %s875
          %s877 = sand.u32 %s53, 1
          %s878 = smul.addr %s877, 288
          %s879 = scalar_lea.vmem [#allocation5], %s878
          %881 = dma.done %s876, 4608
        $region47: #{tpu_custom_call.1} parent=42 // pred_fallthru
          _
      $region43: #{tpu_custom_call.1} parent=5 // pred_fallthru
        _
    $region6: #{tpu_custom_call.1} parent=1 // loop_footer
      %s17 = sadd.s32 1, %s13
    $region7: #{tpu_custom_call.1} parent=1 // loop_footer_branch
      %12 = sbr.rel target = $region3
    $region8: #{tpu_custom_call.1} parent=1 // loop_exit
      _
    %882 = vsyncpa [#allocation3], 1
    %s883 = scalar_lea.sflag [#allocation3], 1
    %884 = vsyncpa %s883, 1
    %885 = vsyncpa [#allocation4], 1
    %s886 = scalar_lea.sflag [#allocation4], 1
    %887 = vsyncpa %s886, 1

</llo_original>
